<compile_context>
chip_gen: v7x
topology: tpu7x:2x2x1
jax: 0.10.0
libtpu: 0.0.40
codegen_flags: <defaults>
</compile_context>

<pallas_src>
import functools

import jax
import jax.numpy as jnp
from jax.experimental import pallas as pl
from jax.experimental.pallas import tpu as pltpu

IN_F = 28 * 28          # 784
H0, H1, H2 = 512, 128, 512
OUT_F = 10
OUT_PAD = 128           # lane-dense padded output width


def _round_up(x, m):
    return ((x + m - 1) // m) * m


def _choose_batch_tiling(B, tb):
    """Pick (TB, B_pad): TB a multiple of 16, minimal padded work, and >= 2
    grid steps when the batch is big enough (so v7x shards the parallel axis
    across both TensorCores)."""
    B16 = _round_up(max(B, 1), 16)
    tb = max(16, min(_round_up(tb, 16), B16))
    min_steps = 2 if B16 >= 32 else 1
    best = None
    for TB in range(16, tb + 1, 16):
        steps = -(-B16 // TB)
        if steps < min_steps:
            continue
        # Per-grid-step fixed overhead (~0.35us) ~= a ~128-row tile of MXU
        # work; minimize (padded rows + amortized overhead), prefer larger TB.
        cost = steps * (TB + 128)
        key = (cost, -TB)
        if best is None or key < best[0]:
            best = (key, TB, steps)
    _, TB, steps = best
    return TB, TB * steps


def _mlp_kernel(x_ref, w0_ref, b0_ref, w1_ref, b1_ref,
                w2_ref, b2_ref, w3_ref, b3_ref, o_ref):
    # Input tile arrives as f32; cast to bf16 in-kernel (hides under MXU slack
    # and avoids a separate wrapper-side HBM cast pass). MXU accumulates in
    # f32; bias + ReLU run in f32 on the VPU; recast to bf16 between layers.
    x = x_ref[...].astype(jnp.bfloat16)

    h = jnp.dot(x, w0_ref[...], preferred_element_type=jnp.float32) + b0_ref[...]
    h = jnp.maximum(h, 0.0).astype(jnp.bfloat16)

    h = jnp.dot(h, w1_ref[...], preferred_element_type=jnp.float32) + b1_ref[...]
    h = jnp.maximum(h, 0.0).astype(jnp.bfloat16)

    h = jnp.dot(h, w2_ref[...], preferred_element_type=jnp.float32) + b2_ref[...]
    h = jnp.maximum(h, 0.0).astype(jnp.bfloat16)

    out = jnp.dot(h, w3_ref[...], preferred_element_type=jnp.float32) + b3_ref[...]
    o_ref[...] = out.astype(o_ref.dtype)


@functools.partial(jax.jit, static_argnames=("tb",))
def mlp_forward(x, params, *, tb=1024):
    """x: [B, 1, 28, 28] (anything flattening to [B, 784]); returns f32 [B, 10]."""
    B = x.shape[0]
    x2d = x.reshape(B, -1).astype(jnp.float32)   # flatten only; bf16 cast is in-kernel
    assert x2d.shape[1] == IN_F

    TB, B_pad = _choose_batch_tiling(B, tb)
    if B_pad != B:
        x2d = jnp.pad(x2d, ((0, B_pad - B), (0, 0)))

    (w0, b0), (w1, b1), (w2, b2), (w3, b3) = params

    # bf16 weights; f32 biases presented as [1, N] for in-kernel broadcast.
    # Final layer padded 10 -> 128 output lanes (zeros) for lane-dense stores.
    w3p = jnp.pad(w3, ((0, 0), (0, OUT_PAD - OUT_F)))
    b3p = jnp.pad(b3, ((0, OUT_PAD - OUT_F),))
    args = (x2d,
            w0.astype(jnp.bfloat16), b0.astype(jnp.float32).reshape(1, -1),
            w1.astype(jnp.bfloat16), b1.astype(jnp.float32).reshape(1, -1),
            w2.astype(jnp.bfloat16), b2.astype(jnp.float32).reshape(1, -1),
            w3p.astype(jnp.bfloat16), b3p.astype(jnp.float32).reshape(1, -1))

    # Weights/biases: full block, constant block index -> stay VMEM resident.
    resident = lambda a: pl.BlockSpec(a.shape, lambda i: (0,) * a.ndim)

    grid = (B_pad // TB,)
    flops = 2 * B_pad * (IN_F * H0 + H0 * H1 + H1 * H2 + H2 * OUT_PAD)
    bytes_accessed = sum(int(a.size) * a.dtype.itemsize for a in args) \
        + B_pad * OUT_PAD * 2   # bf16 output writeback

    out = pl.pallas_call(
        _mlp_kernel,
        out_shape=jax.ShapeDtypeStruct((B_pad, OUT_PAD), jnp.bfloat16),
        grid=grid,
        in_specs=[pl.BlockSpec((TB, IN_F), lambda i: (i, 0))]
                 + [resident(a) for a in args[1:]],
        out_specs=pl.BlockSpec((TB, OUT_PAD), lambda i: (i, 0)),
        compiler_params=pltpu.CompilerParams(
            dimension_semantics=("parallel",),
            vmem_limit_bytes=32 << 20,
        ),
        cost_estimate=pl.CostEstimate(
            flops=flops, transcendentals=0, bytes_accessed=bytes_accessed),
    )(*args)

    return out[:B, :OUT_F].astype(jnp.float32)


def init_params(key):
    """PyTorch-style init U(-1/sqrt(fan_in), 1/sqrt(fan_in)); W stored (in, out)."""
    dims = [(IN_F, H0), (H0, H1), (H1, H2), (H2, OUT_F)]
    params = []
    for fan_in, fan_out in dims:
        key, kw, kb = jax.random.split(key, 3)
        bound = 1.0 / jnp.sqrt(jnp.float32(fan_in))
        w = jax.random.uniform(kw, (fan_in, fan_out), jnp.float32, -bound, bound)
        b = jax.random.uniform(kb, (fan_out,), jnp.float32, -bound, bound)
        params.append((w, b))
    return params


def mlp_reference(x, params):
    """Pure-JAX reference mirroring the kernel's bf16-weight / f32-acc /
    bf16-output math."""
    h = x.reshape(x.shape[0], -1).astype(jnp.bfloat16)
    (w0, b0), (w1, b1), (w2, b2), (w3, b3) = params
    for i, (w, b) in enumerate(((w0, b0), (w1, b1), (w2, b2), (w3, b3))):
        acc = jnp.dot(h, w.astype(jnp.bfloat16),
                      preferred_element_type=jnp.float32) + b
        if i < 3:
            h = jnp.maximum(acc, 0.0).astype(jnp.bfloat16)
        else:
            return acc.astype(jnp.bfloat16).astype(jnp.float32)


if __name__ == "__main__":
    key = jax.random.PRNGKey(0)
    kx, kx2, kp = jax.random.split(key, 3)
    params = init_params(kp)

    # Small deterministic NCHW input, as the torch module expects.
    x = jax.random.normal(kx, (2, 1, 28, 28), jnp.float32)
    out = jax.block_until_ready(mlp_forward(x, params))
    ref = mlp_reference(x, params)
    assert out.shape == (2, 10), out.shape
    assert jnp.allclose(out, ref, atol=2e-3, rtol=2e-3), "mismatch vs reference (B=2)"

    # Second check: awkward batch size to exercise multi-step grid + padding path.
    x2 = jax.random.normal(kx2, (40, 1, 28, 28), jnp.float32)
    out2 = jax.block_until_ready(mlp_forward(x2, params))
    ref2 = mlp_reference(x2, params)
    assert out2.shape == (40, 10), out2.shape
    assert jnp.allclose(out2, ref2, atol=2e-3, rtol=2e-3), "mismatch vs reference (B=40)"

    print("KERNEL_OK")
</pallas_src>

<mosaic_0001>
module attributes {stable_mosaic.version = 11 : i64} {
  func.func @_mlp_kernel(%arg0: i32, %arg1: memref<16x784xf32, #tpu.memory_space<vmem>>, %arg2: memref<784x512xbf16, #tpu.memory_space<vmem>>, %arg3: memref<1x512xf32, #tpu.memory_space<vmem>>, %arg4: memref<512x128xbf16, #tpu.memory_space<vmem>>, %arg5: memref<1x128xf32, #tpu.memory_space<vmem>>, %arg6: memref<128x512xbf16, #tpu.memory_space<vmem>>, %arg7: memref<1x512xf32, #tpu.memory_space<vmem>>, %arg8: memref<512x128xbf16, #tpu.memory_space<vmem>>, %arg9: memref<1x128xf32, #tpu.memory_space<vmem>>, %arg10: memref<16x128xbf16, #tpu.memory_space<vmem>>) attributes {dimension_semantics = [#tpu.dimension_semantics<parallel>], iteration_bounds = array<i64: 1>, scalar_prefetch = 0 : i64, scratch_operands = 0 : i64, tpu.core_type = #tpu.core_type<tc>, window_params = [{transform_indices = @transform_0, window_bounds = array<i64: 16, 784>}, {pipeline_mode = #tpu.pipeline_mode<synchronous>, transform_indices = @transform_1, window_bounds = array<i64: 784, 512>}, {pipeline_mode = #tpu.pipeline_mode<synchronous>, transform_indices = @transform_2, window_bounds = array<i64: 1, 512>}, {pipeline_mode = #tpu.pipeline_mode<synchronous>, transform_indices = @transform_3, window_bounds = array<i64: 512, 128>}, {pipeline_mode = #tpu.pipeline_mode<synchronous>, transform_indices = @transform_4, window_bounds = array<i64: 1, 128>}, {pipeline_mode = #tpu.pipeline_mode<synchronous>, transform_indices = @transform_5, window_bounds = array<i64: 128, 512>}, {pipeline_mode = #tpu.pipeline_mode<synchronous>, transform_indices = @transform_6, window_bounds = array<i64: 1, 512>}, {pipeline_mode = #tpu.pipeline_mode<synchronous>, transform_indices = @transform_7, window_bounds = array<i64: 512, 128>}, {pipeline_mode = #tpu.pipeline_mode<synchronous>, transform_indices = @transform_8, window_bounds = array<i64: 1, 128>}, {transform_indices = @transform_9, window_bounds = array<i64: 16, 128>}]} {
    %c0 = arith.constant 0 : index
    %c0_0 = arith.constant 0 : index
    %0 = vector.load %arg1[%c0, %c0_0] : memref<16x784xf32, #tpu.memory_space<vmem>>, vector<16x784xf32>
    %1 = arith.truncf %0 : vector<16x784xf32> to vector<16x784xbf16>
    %c0_1 = arith.constant 0 : index
    %c0_2 = arith.constant 0 : index
    %2 = vector.load %arg2[%c0_1, %c0_2] : memref<784x512xbf16, #tpu.memory_space<vmem>>, vector<784x512xbf16>
    %cst = arith.constant dense<0.000000e+00> : vector<16x512xf32>
    %3 = tpu.matmul %1, %2, %cst {dimension_numbers = #tpu.dot_dimension_numbers<[1], [0], [0], [1], [0, 0, 1, 1], [], []>} : vector<16x784xbf16>, vector<784x512xbf16>, vector<16x512xf32> -> vector<16x512xf32>
    %c0_3 = arith.constant 0 : index
    %c0_4 = arith.constant 0 : index
    %4 = vector.load %arg3[%c0_3, %c0_4] : memref<1x512xf32, #tpu.memory_space<vmem>>, vector<1x512xf32>
    %5 = vector.broadcast %4 : vector<1x512xf32> to vector<16x512xf32>
    %6 = arith.addf %3, %5 : vector<16x512xf32>
    %cst_5 = arith.constant 0.000000e+00 : f32
    %7 = vector.broadcast %cst_5 : f32 to vector<16x512xf32>
    %8 = arith.maximumf %6, %7 : vector<16x512xf32>
    %9 = arith.truncf %8 : vector<16x512xf32> to vector<16x512xbf16>
    %c0_6 = arith.constant 0 : index
    %c0_7 = arith.constant 0 : index
    %10 = vector.load %arg4[%c0_6, %c0_7] : memref<512x128xbf16, #tpu.memory_space<vmem>>, vector<512x128xbf16>
    %cst_8 = arith.constant dense<0.000000e+00> : vector<16x128xf32>
    %11 = tpu.matmul %9, %10, %cst_8 {dimension_numbers = #tpu.dot_dimension_numbers<[1], [0], [0], [1], [0, 0, 1, 1], [], []>} : vector<16x512xbf16>, vector<512x128xbf16>, vector<16x128xf32> -> vector<16x128xf32>
    %c0_9 = arith.constant 0 : index
    %c0_10 = arith.constant 0 : index
    %12 = vector.load %arg5[%c0_9, %c0_10] : memref<1x128xf32, #tpu.memory_space<vmem>>, vector<1x128xf32>
    %13 = vector.broadcast %12 : vector<1x128xf32> to vector<16x128xf32>
    %14 = arith.addf %11, %13 : vector<16x128xf32>
    %cst_11 = arith.constant 0.000000e+00 : f32
    %15 = vector.broadcast %cst_11 : f32 to vector<16x128xf32>
    %16 = arith.maximumf %14, %15 : vector<16x128xf32>
    %17 = arith.truncf %16 : vector<16x128xf32> to vector<16x128xbf16>
    %c0_12 = arith.constant 0 : index
    %c0_13 = arith.constant 0 : index
    %18 = vector.load %arg6[%c0_12, %c0_13] : memref<128x512xbf16, #tpu.memory_space<vmem>>, vector<128x512xbf16>
    %cst_14 = arith.constant dense<0.000000e+00> : vector<16x512xf32>
    %19 = tpu.matmul %17, %18, %cst_14 {dimension_numbers = #tpu.dot_dimension_numbers<[1], [0], [0], [1], [0, 0, 1, 1], [], []>} : vector<16x128xbf16>, vector<128x512xbf16>, vector<16x512xf32> -> vector<16x512xf32>
    %c0_15 = arith.constant 0 : index
    %c0_16 = arith.constant 0 : index
    %20 = vector.load %arg7[%c0_15, %c0_16] : memref<1x512xf32, #tpu.memory_space<vmem>>, vector<1x512xf32>
    %21 = vector.broadcast %20 : vector<1x512xf32> to vector<16x512xf32>
    %22 = arith.addf %19, %21 : vector<16x512xf32>
    %cst_17 = arith.constant 0.000000e+00 : f32
    %23 = vector.broadcast %cst_17 : f32 to vector<16x512xf32>
    %24 = arith.maximumf %22, %23 : vector<16x512xf32>
    %25 = arith.truncf %24 : vector<16x512xf32> to vector<16x512xbf16>
    %c0_18 = arith.constant 0 : index
    %c0_19 = arith.constant 0 : index
    %26 = vector.load %arg8[%c0_18, %c0_19] : memref<512x128xbf16, #tpu.memory_space<vmem>>, vector<512x128xbf16>
    %cst_20 = arith.constant dense<0.000000e+00> : vector<16x128xf32>
    %27 = tpu.matmul %25, %26, %cst_20 {dimension_numbers = #tpu.dot_dimension_numbers<[1], [0], [0], [1], [0, 0, 1, 1], [], []>} : vector<16x512xbf16>, vector<512x128xbf16>, vector<16x128xf32> -> vector<16x128xf32>
    %c0_21 = arith.constant 0 : index
    %c0_22 = arith.constant 0 : index
    %28 = vector.load %arg9[%c0_21, %c0_22] : memref<1x128xf32, #tpu.memory_space<vmem>>, vector<1x128xf32>
    %29 = vector.broadcast %28 : vector<1x128xf32> to vector<16x128xf32>
    %30 = arith.addf %27, %29 : vector<16x128xf32>
    %31 = arith.truncf %30 : vector<16x128xf32> to vector<16x128xbf16>
    %c0_23 = arith.constant 0 : index
    %c0_24 = arith.constant 0 : index
    %32 = vector.load %arg10[%c0_23, %c0_24] : memref<16x128xbf16, #tpu.memory_space<vmem>>, vector<16x128xbf16>
    tpu.vector_store %arg10[%c0_23, %c0_24], %31 {strides = array<i32>} : memref<16x128xbf16, #tpu.memory_space<vmem>>, vector<16x128xbf16>,
    return
  }
  func.func @transform_0(%arg0: i32) -> (i32, i32) {
    %c0_i32 = arith.constant 0 : i32
    %c0_i32_0 = arith.constant 0 : i32
    return %arg0, %c0_i32 : i32, i32
  }
  func.func @transform_1(%arg0: i32) -> (i32, i32) {
    %c0_i32 = arith.constant 0 : i32
    %c0_i32_0 = arith.constant 0 : i32
    %c0_i32_1 = arith.constant 0 : i32
    return %c0_i32, %c0_i32_0 : i32, i32
  }
  func.func @transform_2(%arg0: i32) -> (i32, i32) {
    %c0_i32 = arith.constant 0 : i32
    %c0_i32_0 = arith.constant 0 : i32
    %c0_i32_1 = arith.constant 0 : i32
    return %c0_i32, %c0_i32_0 : i32, i32
  }
  func.func @transform_3(%arg0: i32) -> (i32, i32) {
    %c0_i32 = arith.constant 0 : i32
    %c0_i32_0 = arith.constant 0 : i32
    %c0_i32_1 = arith.constant 0 : i32
    return %c0_i32, %c0_i32_0 : i32, i32
  }
  func.func @transform_4(%arg0: i32) -> (i32, i32) {
    %c0_i32 = arith.constant 0 : i32
    %c0_i32_0 = arith.constant 0 : i32
    %c0_i32_1 = arith.constant 0 : i32
    return %c0_i32, %c0_i32_0 : i32, i32
  }
  func.func @transform_5(%arg0: i32) -> (i32, i32) {
    %c0_i32 = arith.constant 0 : i32
    %c0_i32_0 = arith.constant 0 : i32
    %c0_i32_1 = arith.constant 0 : i32
    return %c0_i32, %c0_i32_0 : i32, i32
  }
  func.func @transform_6(%arg0: i32) -> (i32, i32) {
    %c0_i32 = arith.constant 0 : i32
    %c0_i32_0 = arith.constant 0 : i32
    %c0_i32_1 = arith.constant 0 : i32
    return %c0_i32, %c0_i32_0 : i32, i32
  }
  func.func @transform_7(%arg0: i32) -> (i32, i32) {
    %c0_i32 = arith.constant 0 : i32
    %c0_i32_0 = arith.constant 0 : i32
    %c0_i32_1 = arith.constant 0 : i32
    return %c0_i32, %c0_i32_0 : i32, i32
  }
  func.func @transform_8(%arg0: i32) -> (i32, i32) {
    %c0_i32 = arith.constant 0 : i32
    %c0_i32_0 = arith.constant 0 : i32
    %c0_i32_1 = arith.constant 0 : i32
    return %c0_i32, %c0_i32_0 : i32, i32
  }
  func.func @transform_9(%arg0: i32) -> (i32, i32) {
    %c0_i32 = arith.constant 0 : i32
    %c0_i32_0 = arith.constant 0 : i32
    return %arg0, %c0_i32 : i32, i32
  }
}

</mosaic_0001>

<llo_original>
// kernel: mlp_forward.1
$region0: #{mlp_forward.1}
  #allocation0 [shape = 'u32[]', space=smem, size = 0x4, offset = 0x4, fixed_abs, tag = 'smem constant byte address 0x4 - core index']
  #allocation1 [shape = 'u32[144,128]{1,0:T(1,128)}', space=vmem, size = 0x12000, scoped, tag = 'internal scratch']
  %s0 = inlined_call_operand.vmem [shape: f32[16,784], index: 0, kind: input, shape index: {}]
  %s1 = inlined_call_operand.vmem [shape: bf16[784,512], index: 1, kind: input, shape index: {}]
  %s2 = inlined_call_operand.vmem [shape: f32[1,512], index: 2, kind: input, shape index: {}]
  %s3 = inlined_call_operand.vmem [shape: bf16[512,128], index: 3, kind: input, shape index: {}]
  %s4 = inlined_call_operand.vmem [shape: f32[1,128], index: 4, kind: input, shape index: {}]
  %s5 = inlined_call_operand.vmem [shape: bf16[128,512], index: 5, kind: input, shape index: {}]
  %s6 = inlined_call_operand.vmem [shape: f32[1,512], index: 6, kind: input, shape index: {}]
  %s7 = inlined_call_operand.vmem [shape: bf16[512,128], index: 7, kind: input, shape index: {}]
  %s8 = inlined_call_operand.vmem [shape: f32[1,128], index: 8, kind: input, shape index: {}]
  %s9 = inlined_call_operand.vmem [shape: bf16[16,128], index: 9, kind: output, shape index: {}]
  %s10 = sld [smem:[#allocation0]]
  $region46: #{mlp_forward.1} parent=0
    _
  %s12 = ssub.s32 1, %s10
  %s13 = scalar_select 0, %s12, %s10
  // Predicated region
  $region2: #{mlp_forward.1} parent=0 // pred_check
    _
  $region3: #{mlp_forward.1} parent=0 // pred_check_branch
    %15 = sbr.rel (0) target = $region5
  $region4: #{mlp_forward.1} parent=0 // pred_region
    _
  $region5: #{mlp_forward.1} parent=0 // pred_fallthru
    _
  // Predicated region
  $region6: #{mlp_forward.1} parent=0 // pred_check
    _
  $region7: #{mlp_forward.1} parent=0 // pred_check_branch
    %17 = sbr.rel (0) target = $region9
  $region8: #{mlp_forward.1} parent=0 // pred_region
    _
  $region9: #{mlp_forward.1} parent=0 // pred_fallthru
    _
  // Predicated region
  $region10: #{mlp_forward.1} parent=0 // pred_check
    _
  $region11: #{mlp_forward.1} parent=0 // pred_check_branch
    %19 = sbr.rel (0) target = $region13
  $region12: #{mlp_forward.1} parent=0 // pred_region
    _
  $region13: #{mlp_forward.1} parent=0 // pred_fallthru
    _
  // Predicated region
  $region14: #{mlp_forward.1} parent=0 // pred_check
    _
  $region15: #{mlp_forward.1} parent=0 // pred_check_branch
    %21 = sbr.rel (0) target = $region17
  $region16: #{mlp_forward.1} parent=0 // pred_region
    _
  $region17: #{mlp_forward.1} parent=0 // pred_fallthru
    _
  // Predicated region
  $region18: #{mlp_forward.1} parent=0 // pred_check
    _
  $region19: #{mlp_forward.1} parent=0 // pred_check_branch
    %23 = sbr.rel (0) target = $region21
  $region20: #{mlp_forward.1} parent=0 // pred_region
    _
  $region21: #{mlp_forward.1} parent=0 // pred_fallthru
    _
  // Predicated region
  $region22: #{mlp_forward.1} parent=0 // pred_check
    _
  $region23: #{mlp_forward.1} parent=0 // pred_check_branch
    %25 = sbr.rel (0) target = $region25
  $region24: #{mlp_forward.1} parent=0 // pred_region
    _
  $region25: #{mlp_forward.1} parent=0 // pred_fallthru
    _
  // Predicated region
  $region26: #{mlp_forward.1} parent=0 // pred_check
    _
  $region27: #{mlp_forward.1} parent=0 // pred_check_branch
    %27 = sbr.rel (0) target = $region29
  $region28: #{mlp_forward.1} parent=0 // pred_region
    _
  $region29: #{mlp_forward.1} parent=0 // pred_fallthru
    _
  // Predicated region
  $region30: #{mlp_forward.1} parent=0 // pred_check
    _
  $region31: #{mlp_forward.1} parent=0 // pred_check_branch
    %29 = sbr.rel (0) target = $region33
  $region32: #{mlp_forward.1} parent=0 // pred_region
    _
  $region33: #{mlp_forward.1} parent=0 // pred_fallthru
    _
  // Predicated region
  $region34: #{mlp_forward.1} parent=0 // pred_check
    _
  $region35: #{mlp_forward.1} parent=0 // pred_check_branch
    %31 = sbr.rel (0) target = $region37
  $region36: #{mlp_forward.1} parent=0 // pred_region
    _
  $region37: #{mlp_forward.1} parent=0 // pred_fallthru
    _
  %v33 = vld [vmem:[%s0] sm:$0xff]
  %v34 = vld [vmem:[%s0 + $0x8] sm:$0xff]
  %v35 = vld [vmem:[%s0 + $0x10] sm:$0xff]
  %v36 = vld [vmem:[%s0 + $0x18] sm:$0xff]
  %v37 = vld [vmem:[%s0 + $0x20] sm:$0xff]
  %v38 = vld [vmem:[%s0 + $0x28] sm:$0xff]
  %v39 = vld [vmem:[%s0 + $0x30] sm:$0xff]
  %v40 = vld [vmem:[%s0 + $0x38] sm:$0xff]
  %v41 = vld [vmem:[%s0 + $0x40] sm:$0xff]
  %v42 = vld [vmem:[%s0 + $0x48] sm:$0xff]
  %v43 = vld [vmem:[%s0 + $0x50] sm:$0xff]
  %v44 = vld [vmem:[%s0 + $0x58] sm:$0xff]
  %v45 = vld [vmem:[%s0 + $0x60] sm:$0xff]
  %v46 = vld [vmem:[%s0 + $0x68] sm:$0xff]
  %v47 = vpack.c.bf16 %v40, %v33
  %v48 = vpack.c.bf16 %v41, %v34
  %v49 = vpack.c.bf16 %v42, %v35
  %v50 = vpack.c.bf16 %v43, %v36
  %v51 = vpack.c.bf16 %v44, %v37
  %v52 = vpack.c.bf16 %v45, %v38
  %v53 = vpack.c.bf16 %v46, %v39
  %v54 = vld [vmem:[%s1] sm:$0xff]
  %v55 = vld [vmem:[%s1 + $0x8] sm:$0xff]
  %v56 = vld [vmem:[%s1 + $0x10] sm:$0xff]
  %v57 = vld [vmem:[%s1 + $0x18] sm:$0xff]
  %v58 = vld [vmem:[%s1 + $0x20] sm:$0xff]
  %v59 = vld [vmem:[%s1 + $0x28] sm:$0xff]
  %v60 = vld [vmem:[%s1 + $0x30] sm:$0xff]
  %v61 = vld [vmem:[%s1 + $0x38] sm:$0xff]
  %v62 = vld [vmem:[%s1 + $0x40] sm:$0xff]
  %v63 = vld [vmem:[%s1 + $0x48] sm:$0xff]
  %v64 = vld [vmem:[%s1 + $0x50] sm:$0xff]
  %v65 = vld [vmem:[%s1 + $0x58] sm:$0xff]
  %v66 = vld [vmem:[%s1 + $0x60] sm:$0xff]
  %v67 = vld [vmem:[%s1 + $0x68] sm:$0xff]
  %v68 = vld [vmem:[%s1 + $0x70] sm:$0xff]
  %v69 = vld [vmem:[%s1 + $0x78] sm:$0xff]
  %v70 = vld [vmem:[%s1 + $0x80] sm:$0xff]
  %v71 = vld [vmem:[%s1 + $0x88] sm:$0xff]
  %v72 = vld [vmem:[%s1 + $0x90] sm:$0xff]
  %v73 = vld [vmem:[%s1 + $0x98] sm:$0xff]
  %v74 = vld [vmem:[%s1 + $0xa0] sm:$0xff]
  %v75 = vld [vmem:[%s1 + $0xa8] sm:$0xff]
  %v76 = vld [vmem:[%s1 + $0xb0] sm:$0xff]
  %v77 = vld [vmem:[%s1 + $0xb8] sm:$0xff]
  %v78 = vld [vmem:[%s1 + $0xc0] sm:$0xff]
  %v79 = vld [vmem:[%s1 + $0xc8] sm:$0xff]
  %v80 = vld [vmem:[%s1 + $0xd0] sm:$0xff]
  %v81 = vld [vmem:[%s1 + $0xd8] sm:$0xff]
  %v82 = vld [vmem:[%s1 + $0xe0] sm:$0xff]
  %v83 = vld [vmem:[%s1 + $0xe8] sm:$0xff]
  %v84 = vld [vmem:[%s1 + $0xf0] sm:$0xff]
  %v85 = vld [vmem:[%s1 + $0xf8] sm:$0xff]
  %v86 = vld [vmem:[%s1 + $0x100] sm:$0xff]
  %v87 = vld [vmem:[%s1 + $0x108] sm:$0xff]
  %v88 = vld [vmem:[%s1 + $0x110] sm:$0xff]
  %v89 = vld [vmem:[%s1 + $0x118] sm:$0xff]
  %v90 = vld [vmem:[%s1 + $0x120] sm:$0xff]
  %v91 = vld [vmem:[%s1 + $0x128] sm:$0xff]
  %v92 = vld [vmem:[%s1 + $0x130] sm:$0xff]
  %v93 = vld [vmem:[%s1 + $0x138] sm:$0xff]
  %v94 = vld [vmem:[%s1 + $0x140] sm:$0xff]
  %v95 = vld [vmem:[%s1 + $0x148] sm:$0xff]
  %v96 = vld [vmem:[%s1 + $0x150] sm:$0xff]
  %v97 = vld [vmem:[%s1 + $0x158] sm:$0xff]
  %v98 = vld [vmem:[%s1 + $0x160] sm:$0xff]
  %v99 = vld [vmem:[%s1 + $0x168] sm:$0xff]
  %v100 = vld [vmem:[%s1 + $0x170] sm:$0xff]
  %v101 = vld [vmem:[%s1 + $0x178] sm:$0xff]
  %v102 = vld [vmem:[%s1 + $0x180] sm:$0xff]
  %v103 = vld [vmem:[%s1 + $0x188] sm:$0xff]
  %v104 = vld [vmem:[%s1 + $0x190] sm:$0xff]
  %v105 = vld [vmem:[%s1 + $0x198] sm:$0xff]
  %v106 = vld [vmem:[%s1 + $0x1a0] sm:$0xff]
  %v107 = vld [vmem:[%s1 + $0x1a8] sm:$0xff]
  %v108 = vld [vmem:[%s1 + $0x1b0] sm:$0xff]
  %v109 = vld [vmem:[%s1 + $0x1b8] sm:$0xff]
  %v110 = vld [vmem:[%s1 + $0x1c0] sm:$0xff]
  %v111 = vld [vmem:[%s1 + $0x1c8] sm:$0xff]
  %v112 = vld [vmem:[%s1 + $0x1d0] sm:$0xff]
  %v113 = vld [vmem:[%s1 + $0x1d8] sm:$0xff]
  %v114 = vld [vmem:[%s1 + $0x1e0] sm:$0xff]
  %v115 = vld [vmem:[%s1 + $0x1e8] sm:$0xff]
  %v116 = vld [vmem:[%s1 + $0x1f0] sm:$0xff]
  %v117 = vld [vmem:[%s1 + $0x1f8] sm:$0xff]
  %v118 = vld [vmem:[%s1 + $0x200] sm:$0xff]
  %v119 = vld [vmem:[%s1 + $0x208] sm:$0xff]
  %v120 = vld [vmem:[%s1 + $0x210] sm:$0xff]
  %v121 = vld [vmem:[%s1 + $0x218] sm:$0xff]
  %v122 = vld [vmem:[%s1 + $0x220] sm:$0xff]
  %v123 = vld [vmem:[%s1 + $0x228] sm:$0xff]
  %v124 = vld [vmem:[%s1 + $0x230] sm:$0xff]
  %v125 = vld [vmem:[%s1 + $0x238] sm:$0xff]
  %v126 = vld [vmem:[%s1 + $0x240] sm:$0xff]
  %v127 = vld [vmem:[%s1 + $0x248] sm:$0xff]
  %v128 = vld [vmem:[%s1 + $0x250] sm:$0xff]
  %v129 = vld [vmem:[%s1 + $0x258] sm:$0xff]
  %v130 = vld [vmem:[%s1 + $0x260] sm:$0xff]
  %v131 = vld [vmem:[%s1 + $0x268] sm:$0xff]
  %v132 = vld [vmem:[%s1 + $0x270] sm:$0xff]
  %v133 = vld [vmem:[%s1 + $0x278] sm:$0xff]
  %v134 = vld [vmem:[%s1 + $0x280] sm:$0xff]
  %v135 = vld [vmem:[%s1 + $0x288] sm:$0xff]
  %v136 = vld [vmem:[%s1 + $0x290] sm:$0xff]
  %v137 = vld [vmem:[%s1 + $0x298] sm:$0xff]
  %v138 = vld [vmem:[%s1 + $0x2a0] sm:$0xff]
  %v139 = vld [vmem:[%s1 + $0x2a8] sm:$0xff]
  %v140 = vld [vmem:[%s1 + $0x2b0] sm:$0xff]
  %v141 = vld [vmem:[%s1 + $0x2b8] sm:$0xff]
  %v142 = vld [vmem:[%s1 + $0x2c0] sm:$0xff]
  %v143 = vld [vmem:[%s1 + $0x2c8] sm:$0xff]
  %v144 = vld [vmem:[%s1 + $0x2d0] sm:$0xff]
  %v145 = vld [vmem:[%s1 + $0x2d8] sm:$0xff]
  %v146 = vld [vmem:[%s1 + $0x2e0] sm:$0xff]
  %v147 = vld [vmem:[%s1 + $0x2e8] sm:$0xff]
  %v148 = vld [vmem:[%s1 + $0x2f0] sm:$0xff]
  %v149 = vld [vmem:[%s1 + $0x2f8] sm:$0xff]
  %v150 = vld [vmem:[%s1 + $0x300] sm:$0xff]
  %v151 = vld [vmem:[%s1 + $0x308] sm:$0xff]
  %v152 = vld [vmem:[%s1 + $0x310] sm:$0xff]
  %v153 = vld [vmem:[%s1 + $0x318] sm:$0xff]
  %v154 = vld [vmem:[%s1 + $0x320] sm:$0xff]
  %v155 = vld [vmem:[%s1 + $0x328] sm:$0xff]
  %v156 = vld [vmem:[%s1 + $0x330] sm:$0xff]
  %v157 = vld [vmem:[%s1 + $0x338] sm:$0xff]
  %v158 = vld [vmem:[%s1 + $0x340] sm:$0xff]
  %v159 = vld [vmem:[%s1 + $0x348] sm:$0xff]
  %v160 = vld [vmem:[%s1 + $0x350] sm:$0xff]
  %v161 = vld [vmem:[%s1 + $0x358] sm:$0xff]
  %v162 = vld [vmem:[%s1 + $0x360] sm:$0xff]
  %v163 = vld [vmem:[%s1 + $0x368] sm:$0xff]
  %v164 = vld [vmem:[%s1 + $0x370] sm:$0xff]
  %v165 = vld [vmem:[%s1 + $0x378] sm:$0xff]
  %v166 = vld [vmem:[%s1 + $0x380] sm:$0xff]
  %v167 = vld [vmem:[%s1 + $0x388] sm:$0xff]
  %v168 = vld [vmem:[%s1 + $0x390] sm:$0xff]
  %v169 = vld [vmem:[%s1 + $0x398] sm:$0xff]
  %v170 = vld [vmem:[%s1 + $0x3a0] sm:$0xff]
  %v171 = vld [vmem:[%s1 + $0x3a8] sm:$0xff]
  %v172 = vld [vmem:[%s1 + $0x3b0] sm:$0xff]
  %v173 = vld [vmem:[%s1 + $0x3b8] sm:$0xff]
  %v174 = vld [vmem:[%s1 + $0x3c0] sm:$0xff]
  %v175 = vld [vmem:[%s1 + $0x3c8] sm:$0xff]
  %v176 = vld [vmem:[%s1 + $0x3d0] sm:$0xff]
  %v177 = vld [vmem:[%s1 + $0x3d8] sm:$0xff]
  %v178 = vld [vmem:[%s1 + $0x3e0] sm:$0xff]
  %v179 = vld [vmem:[%s1 + $0x3e8] sm:$0xff]
  %v180 = vld [vmem:[%s1 + $0x3f0] sm:$0xff]
  %v181 = vld [vmem:[%s1 + $0x3f8] sm:$0xff]
  %v182 = vld [vmem:[%s1 + $0x400] sm:$0xff]
  %v183 = vld [vmem:[%s1 + $0x408] sm:$0xff]
  %v184 = vld [vmem:[%s1 + $0x410] sm:$0xff]
  %v185 = vld [vmem:[%s1 + $0x418] sm:$0xff]
  %v186 = vld [vmem:[%s1 + $0x420] sm:$0xff]
  %v187 = vld [vmem:[%s1 + $0x428] sm:$0xff]
  %v188 = vld [vmem:[%s1 + $0x430] sm:$0xff]
  %v189 = vld [vmem:[%s1 + $0x438] sm:$0xff]
  %v190 = vld [vmem:[%s1 + $0x440] sm:$0xff]
  %v191 = vld [vmem:[%s1 + $0x448] sm:$0xff]
  %v192 = vld [vmem:[%s1 + $0x450] sm:$0xff]
  %v193 = vld [vmem:[%s1 + $0x458] sm:$0xff]
  %v194 = vld [vmem:[%s1 + $0x460] sm:$0xff]
  %v195 = vld [vmem:[%s1 + $0x468] sm:$0xff]
  %v196 = vld [vmem:[%s1 + $0x470] sm:$0xff]
  %v197 = vld [vmem:[%s1 + $0x478] sm:$0xff]
  %v198 = vld [vmem:[%s1 + $0x480] sm:$0xff]
  %v199 = vld [vmem:[%s1 + $0x488] sm:$0xff]
  %v200 = vld [vmem:[%s1 + $0x490] sm:$0xff]
  %v201 = vld [vmem:[%s1 + $0x498] sm:$0xff]
  %v202 = vld [vmem:[%s1 + $0x4a0] sm:$0xff]
  %v203 = vld [vmem:[%s1 + $0x4a8] sm:$0xff]
  %v204 = vld [vmem:[%s1 + $0x4b0] sm:$0xff]
  %v205 = vld [vmem:[%s1 + $0x4b8] sm:$0xff]
  %v206 = vld [vmem:[%s1 + $0x4c0] sm:$0xff]
  %v207 = vld [vmem:[%s1 + $0x4c8] sm:$0xff]
  %v208 = vld [vmem:[%s1 + $0x4d0] sm:$0xff]
  %v209 = vld [vmem:[%s1 + $0x4d8] sm:$0xff]
  %v210 = vld [vmem:[%s1 + $0x4e0] sm:$0xff]
  %v211 = vld [vmem:[%s1 + $0x4e8] sm:$0xff]
  %v212 = vld [vmem:[%s1 + $0x4f0] sm:$0xff]
  %v213 = vld [vmem:[%s1 + $0x4f8] sm:$0xff]
  %v214 = vld [vmem:[%s1 + $0x500] sm:$0xff]
  %v215 = vld [vmem:[%s1 + $0x508] sm:$0xff]
  %v216 = vld [vmem:[%s1 + $0x510] sm:$0xff]
  %v217 = vld [vmem:[%s1 + $0x518] sm:$0xff]
  %v218 = vld [vmem:[%s1 + $0x520] sm:$0xff]
  %v219 = vld [vmem:[%s1 + $0x528] sm:$0xff]
  %v220 = vld [vmem:[%s1 + $0x530] sm:$0xff]
  %v221 = vld [vmem:[%s1 + $0x538] sm:$0xff]
  %v222 = vld [vmem:[%s1 + $0x540] sm:$0xff]
  %v223 = vld [vmem:[%s1 + $0x548] sm:$0xff]
  %v224 = vld [vmem:[%s1 + $0x550] sm:$0xff]
  %v225 = vld [vmem:[%s1 + $0x558] sm:$0xff]
  %v226 = vld [vmem:[%s1 + $0x560] sm:$0xff]
  %v227 = vld [vmem:[%s1 + $0x568] sm:$0xff]
  %v228 = vld [vmem:[%s1 + $0x570] sm:$0xff]
  %v229 = vld [vmem:[%s1 + $0x578] sm:$0xff]
  %v230 = vld [vmem:[%s1 + $0x580] sm:$0xff]
  %v231 = vld [vmem:[%s1 + $0x588] sm:$0xff]
  %v232 = vld [vmem:[%s1 + $0x590] sm:$0xff]
  %v233 = vld [vmem:[%s1 + $0x598] sm:$0xff]
  %v234 = vld [vmem:[%s1 + $0x5a0] sm:$0xff]
  %v235 = vld [vmem:[%s1 + $0x5a8] sm:$0xff]
  %v236 = vld [vmem:[%s1 + $0x5b0] sm:$0xff]
  %v237 = vld [vmem:[%s1 + $0x5b8] sm:$0xff]
  %v238 = vld [vmem:[%s1 + $0x5c0] sm:$0xff]
  %v239 = vld [vmem:[%s1 + $0x5c8] sm:$0xff]
  %v240 = vld [vmem:[%s1 + $0x5d0] sm:$0xff]
  %v241 = vld [vmem:[%s1 + $0x5d8] sm:$0xff]
  %v242 = vld [vmem:[%s1 + $0x5e0] sm:$0xff]
  %v243 = vld [vmem:[%s1 + $0x5e8] sm:$0xff]
  %v244 = vld [vmem:[%s1 + $0x5f0] sm:$0xff]
  %v245 = vld [vmem:[%s1 + $0x5f8] sm:$0xff]
  %v246 = vld [vmem:[%s1 + $0x600] sm:$0xff]
  %v247 = vld [vmem:[%s1 + $0x608] sm:$0xff]
  %v248 = vld [vmem:[%s1 + $0x610] sm:$0xff]
  %v249 = vld [vmem:[%s1 + $0x618] sm:$0xff]
  %v250 = vld [vmem:[%s2] sm:$0xf]
  %v252 = vlaneseq
  %v253 = vshrl.u32 %v252, 7
  %v254 = vsub.s32 0, %v253
  %v255 = vrot.slane %v250, %v254
  %v256 = vlaneseq
  %v257 = vshrl.u32 %v256, 7
  %v258 = vsub.s32 1, %v257
  %v259 = vrot.slane %v250, %v258
  %v260 = vlaneseq
  %v261 = vshrl.u32 %v260, 7
  %v262 = vsub.s32 2, %v261
  %v263 = vrot.slane %v250, %v262
  %v264 = vlaneseq
  %v265 = vshrl.u32 %v264, 7
  %v266 = vsub.s32 3, %v265
  %v267 = vrot.slane %v250, %v266
  %v468 = vunpack.c.l.b16 %v54
  %v469 = vunpack.c.h.b16 %v54
  %v470 = vunpack.c.l.b16 %v55
  %v471 = vunpack.c.h.b16 %v55
  %v472 = vunpack.c.l.b16 %v56
  %v473 = vunpack.c.h.b16 %v56
  %v474 = vunpack.c.l.b16 %v57
  %v475 = vunpack.c.h.b16 %v57
  %v476 = vunpack.c.l.b16 %v58
  %v477 = vunpack.c.h.b16 %v58
  %v478 = vunpack.c.l.b16 %v59
  %v479 = vunpack.c.h.b16 %v59
  %v480 = vunpack.c.l.b16 %v60
  %v481 = vunpack.c.h.b16 %v60
  %v482 = vunpack.c.l.b16 %v61
  %v483 = vunpack.c.h.b16 %v61
  %v484 = vunpack.c.l.b16 %v62
  %v485 = vunpack.c.h.b16 %v62
  %v486 = vunpack.c.l.b16 %v63
  %v487 = vunpack.c.h.b16 %v63
  %v488 = vunpack.c.l.b16 %v64
  %v489 = vunpack.c.h.b16 %v64
  %v490 = vunpack.c.l.b16 %v65
  %v491 = vunpack.c.h.b16 %v65
  %v492 = vunpack.c.l.b16 %v66
  %v493 = vunpack.c.h.b16 %v66
  %v494 = vunpack.c.l.b16 %v67
  %v495 = vunpack.c.h.b16 %v67
  %v496 = vunpack.c.l.b16 %v68
  %v497 = vunpack.c.h.b16 %v68
  %v498 = vunpack.c.l.b16 %v69
  %v499 = vunpack.c.h.b16 %v69
  %v500 = vunpack.c.l.b16 %v70
  %v501 = vunpack.c.h.b16 %v70
  %v502 = vunpack.c.l.b16 %v71
  %v503 = vunpack.c.h.b16 %v71
  %v504 = vunpack.c.l.b16 %v72
  %v505 = vunpack.c.h.b16 %v72
  %v506 = vunpack.c.l.b16 %v73
  %v507 = vunpack.c.h.b16 %v73
  %v508 = vunpack.c.l.b16 %v74
  %v509 = vunpack.c.h.b16 %v74
  %v510 = vunpack.c.l.b16 %v75
  %v511 = vunpack.c.h.b16 %v75
  %v512 = vunpack.c.l.b16 %v76
  %v513 = vunpack.c.h.b16 %v76
  %v514 = vunpack.c.l.b16 %v77
  %v515 = vunpack.c.h.b16 %v77
  %v516 = vunpack.c.l.b16 %v78
  %v517 = vunpack.c.h.b16 %v78
  %v518 = vunpack.c.l.b16 %v79
  %v519 = vunpack.c.h.b16 %v79
  %v520 = vunpack.c.l.b16 %v80
  %v521 = vunpack.c.h.b16 %v80
  %v522 = vunpack.c.l.b16 %v81
  %v523 = vunpack.c.h.b16 %v81
  %v524 = vunpack.c.l.b16 %v82
  %v525 = vunpack.c.h.b16 %v82
  %v526 = vunpack.c.l.b16 %v83
  %v527 = vunpack.c.h.b16 %v83
  %v528 = vunpack.c.l.b16 %v84
  %v529 = vunpack.c.h.b16 %v84
  %v530 = vunpack.c.l.b16 %v85
  %v531 = vunpack.c.h.b16 %v85
  %v532 = vunpack.c.l.b16 %v86
  %v533 = vunpack.c.h.b16 %v86
  %v534 = vunpack.c.l.b16 %v87
  %v535 = vunpack.c.h.b16 %v87
  %v536 = vunpack.c.l.b16 %v88
  %v537 = vunpack.c.h.b16 %v88
  %v538 = vunpack.c.l.b16 %v89
  %v539 = vunpack.c.h.b16 %v89
  %v540 = vunpack.c.l.b16 %v90
  %v541 = vunpack.c.h.b16 %v90
  %v542 = vunpack.c.l.b16 %v91
  %v543 = vunpack.c.h.b16 %v91
  %v544 = vunpack.c.l.b16 %v92
  %v545 = vunpack.c.h.b16 %v92
  %v546 = vunpack.c.l.b16 %v93
  %v547 = vunpack.c.h.b16 %v93
  %v548 = vunpack.c.l.b16 %v94
  %v549 = vunpack.c.h.b16 %v94
  %v550 = vunpack.c.l.b16 %v95
  %v551 = vunpack.c.h.b16 %v95
  %v552 = vunpack.c.l.b16 %v96
  %v553 = vunpack.c.h.b16 %v96
  %v554 = vunpack.c.l.b16 %v97
  %v555 = vunpack.c.h.b16 %v97
  %v556 = vunpack.c.l.b16 %v98
  %v557 = vunpack.c.h.b16 %v98
  %v558 = vunpack.c.l.b16 %v99
  %v559 = vunpack.c.h.b16 %v99
  %v560 = vunpack.c.l.b16 %v100
  %v561 = vunpack.c.h.b16 %v100
  %v562 = vunpack.c.l.b16 %v101
  %v563 = vunpack.c.h.b16 %v101
  %v564 = vunpack.c.l.b16 %v102
  %v565 = vunpack.c.h.b16 %v102
  %v566 = vunpack.c.l.b16 %v103
  %v567 = vunpack.c.h.b16 %v103
  %v568 = vunpack.c.l.b16 %v104
  %v569 = vunpack.c.h.b16 %v104
  %v570 = vunpack.c.l.b16 %v105
  %v571 = vunpack.c.h.b16 %v105
  %v572 = vunpack.c.l.b16 %v106
  %v573 = vunpack.c.h.b16 %v106
  %v574 = vunpack.c.l.b16 %v107
  %v575 = vunpack.c.h.b16 %v107
  %v576 = vunpack.c.l.b16 %v108
  %v577 = vunpack.c.h.b16 %v108
  %v578 = vunpack.c.l.b16 %v109
  %v579 = vunpack.c.h.b16 %v109
  %v580 = vunpack.c.l.b16 %v110
  %v581 = vunpack.c.h.b16 %v110
  %v582 = vunpack.c.l.b16 %v111
  %v583 = vunpack.c.h.b16 %v111
  %v584 = vunpack.c.l.b16 %v112
  %v585 = vunpack.c.h.b16 %v112
  %v586 = vunpack.c.l.b16 %v113
  %v587 = vunpack.c.h.b16 %v113
  %v588 = vunpack.c.l.b16 %v114
  %v589 = vunpack.c.h.b16 %v114
  %v590 = vunpack.c.l.b16 %v115
  %v591 = vunpack.c.h.b16 %v115
  %v592 = vunpack.c.l.b16 %v116
  %v593 = vunpack.c.h.b16 %v116
  %v594 = vunpack.c.l.b16 %v117
  %v595 = vunpack.c.h.b16 %v117
  %v596 = vunpack.c.l.b16 %v118
  %v597 = vunpack.c.h.b16 %v118
  %v598 = vunpack.c.l.b16 %v119
  %v599 = vunpack.c.h.b16 %v119
  %v600 = vunpack.c.l.b16 %v120
  %v601 = vunpack.c.h.b16 %v120
  %v602 = vunpack.c.l.b16 %v121
  %v603 = vunpack.c.h.b16 %v121
  %v604 = vunpack.c.l.b16 %v122
  %v605 = vunpack.c.h.b16 %v122
  %v606 = vunpack.c.l.b16 %v123
  %v607 = vunpack.c.h.b16 %v123
  %v608 = vunpack.c.l.b16 %v124
  %v609 = vunpack.c.h.b16 %v124
  %v610 = vunpack.c.l.b16 %v125
  %v611 = vunpack.c.h.b16 %v125
  %v612 = vunpack.c.l.b16 %v126
  %v613 = vunpack.c.h.b16 %v126
  %v614 = vunpack.c.l.b16 %v127
  %v615 = vunpack.c.h.b16 %v127
  %v616 = vunpack.c.l.b16 %v128
  %v617 = vunpack.c.h.b16 %v128
  %v618 = vunpack.c.l.b16 %v129
  %v619 = vunpack.c.h.b16 %v129
  %v620 = vunpack.c.l.b16 %v130
  %v621 = vunpack.c.h.b16 %v130
  %v622 = vunpack.c.l.b16 %v131
  %v623 = vunpack.c.h.b16 %v131
  %v624 = vunpack.c.l.b16 %v132
  %v625 = vunpack.c.h.b16 %v132
  %v626 = vunpack.c.l.b16 %v133
  %v627 = vunpack.c.h.b16 %v133
  %v628 = vunpack.c.l.b16 %v134
  %v629 = vunpack.c.h.b16 %v134
  %v630 = vunpack.c.l.b16 %v135
  %v631 = vunpack.c.h.b16 %v135
  %v632 = vunpack.c.l.b16 %v136
  %v633 = vunpack.c.h.b16 %v136
  %v634 = vunpack.c.l.b16 %v137
  %v635 = vunpack.c.h.b16 %v137
  %v636 = vunpack.c.l.b16 %v138
  %v637 = vunpack.c.h.b16 %v138
  %v638 = vunpack.c.l.b16 %v139
  %v639 = vunpack.c.h.b16 %v139
  %v640 = vunpack.c.l.b16 %v140
  %v641 = vunpack.c.h.b16 %v140
  %v642 = vunpack.c.l.b16 %v141
  %v643 = vunpack.c.h.b16 %v141
  %v644 = vunpack.c.l.b16 %v142
  %v645 = vunpack.c.h.b16 %v142
  %v646 = vunpack.c.l.b16 %v143
  %v647 = vunpack.c.h.b16 %v143
  %v648 = vunpack.c.l.b16 %v144
  %v649 = vunpack.c.h.b16 %v144
  %v650 = vunpack.c.l.b16 %v145
  %v651 = vunpack.c.h.b16 %v145
  %v652 = vunpack.c.l.b16 %v146
  %v653 = vunpack.c.h.b16 %v146
  %v654 = vunpack.c.l.b16 %v147
  %v655 = vunpack.c.h.b16 %v147
  %v656 = vunpack.c.l.b16 %v148
  %v657 = vunpack.c.h.b16 %v148
  %v658 = vunpack.c.l.b16 %v149
  %v659 = vunpack.c.h.b16 %v149
  %v660 = vunpack.c.l.b16 %v150
  %v661 = vunpack.c.h.b16 %v150
  %v662 = vunpack.c.l.b16 %v151
  %v663 = vunpack.c.h.b16 %v151
  %v664 = vunpack.c.l.b16 %v152
  %v665 = vunpack.c.h.b16 %v152
  %v666 = vunpack.c.l.b16 %v153
  %v667 = vunpack.c.h.b16 %v153
  %v668 = vunpack.c.l.b16 %v154
  %v669 = vunpack.c.h.b16 %v154
  %v670 = vunpack.c.l.b16 %v155
  %v671 = vunpack.c.h.b16 %v155
  %v672 = vunpack.c.l.b16 %v156
  %v673 = vunpack.c.h.b16 %v156
  %v674 = vunpack.c.l.b16 %v157
  %v675 = vunpack.c.h.b16 %v157
  %v676 = vunpack.c.l.b16 %v158
  %v677 = vunpack.c.h.b16 %v158
  %v678 = vunpack.c.l.b16 %v159
  %v679 = vunpack.c.h.b16 %v159
  %v680 = vunpack.c.l.b16 %v160
  %v681 = vunpack.c.h.b16 %v160
  %v682 = vunpack.c.l.b16 %v161
  %v683 = vunpack.c.h.b16 %v161
  %v684 = vunpack.c.l.b16 %v162
  %v685 = vunpack.c.h.b16 %v162
  %v686 = vunpack.c.l.b16 %v163
  %v687 = vunpack.c.h.b16 %v163
  %v688 = vunpack.c.l.b16 %v164
  %v689 = vunpack.c.h.b16 %v164
  %v690 = vunpack.c.l.b16 %v165
  %v691 = vunpack.c.h.b16 %v165
  %v692 = vunpack.c.l.b16 %v166
  %v693 = vunpack.c.h.b16 %v166
  %v694 = vunpack.c.l.b16 %v167
  %v695 = vunpack.c.h.b16 %v167
  %v696 = vunpack.c.l.b16 %v168
  %v697 = vunpack.c.h.b16 %v168
  %v698 = vunpack.c.l.b16 %v169
  %v699 = vunpack.c.h.b16 %v169
  %v700 = vunpack.c.l.b16 %v170
  %v701 = vunpack.c.h.b16 %v170
  %v702 = vunpack.c.l.b16 %v171
  %v703 = vunpack.c.h.b16 %v171
  %v704 = vunpack.c.l.b16 %v172
  %v705 = vunpack.c.h.b16 %v172
  %v706 = vunpack.c.l.b16 %v173
  %v707 = vunpack.c.h.b16 %v173
  %v708 = vunpack.c.l.b16 %v174
  %v709 = vunpack.c.h.b16 %v174
  %v710 = vunpack.c.l.b16 %v175
  %v711 = vunpack.c.h.b16 %v175
  %v712 = vunpack.c.l.b16 %v176
  %v713 = vunpack.c.h.b16 %v176
  %v714 = vunpack.c.l.b16 %v177
  %v715 = vunpack.c.h.b16 %v177
  %v716 = vunpack.c.l.b16 %v178
  %v717 = vunpack.c.h.b16 %v178
  %v718 = vunpack.c.l.b16 %v179
  %v719 = vunpack.c.h.b16 %v179
  %v720 = vunpack.c.l.b16 %v180
  %v721 = vunpack.c.h.b16 %v180
  %v722 = vunpack.c.l.b16 %v181
  %v723 = vunpack.c.h.b16 %v181
  %v724 = vunpack.c.l.b16 %v182
  %v725 = vunpack.c.h.b16 %v182
  %v726 = vunpack.c.l.b16 %v183
  %v727 = vunpack.c.h.b16 %v183
  %v728 = vunpack.c.l.b16 %v184
  %v729 = vunpack.c.h.b16 %v184
  %v730 = vunpack.c.l.b16 %v185
  %v731 = vunpack.c.h.b16 %v185
  %v732 = vunpack.c.l.b16 %v186
  %v733 = vunpack.c.h.b16 %v186
  %v734 = vunpack.c.l.b16 %v187
  %v735 = vunpack.c.h.b16 %v187
  %v736 = vunpack.c.l.b16 %v188
  %v737 = vunpack.c.h.b16 %v188
  %v738 = vunpack.c.l.b16 %v189
  %v739 = vunpack.c.h.b16 %v189
  %v740 = vunpack.c.l.b16 %v190
  %v741 = vunpack.c.h.b16 %v190
  %v742 = vunpack.c.l.b16 %v191
  %v743 = vunpack.c.h.b16 %v191
  %v744 = vunpack.c.l.b16 %v192
  %v745 = vunpack.c.h.b16 %v192
  %v746 = vunpack.c.l.b16 %v193
  %v747 = vunpack.c.h.b16 %v193
  %v748 = vunpack.c.l.b16 %v194
  %v749 = vunpack.c.h.b16 %v194
  %v750 = vunpack.c.l.b16 %v195
  %v751 = vunpack.c.h.b16 %v195
  %v752 = vunpack.c.l.b16 %v196
  %v753 = vunpack.c.h.b16 %v196
  %v754 = vunpack.c.l.b16 %v197
  %v755 = vunpack.c.h.b16 %v197
  %v756 = vunpack.c.l.b16 %v198
  %v757 = vunpack.c.h.b16 %v198
  %v758 = vunpack.c.l.b16 %v199
  %v759 = vunpack.c.h.b16 %v199
  %v760 = vunpack.c.l.b16 %v200
  %v761 = vunpack.c.h.b16 %v200
  %v762 = vunpack.c.l.b16 %v201
  %v763 = vunpack.c.h.b16 %v201
  %v764 = vunpack.c.l.b16 %v202
  %v765 = vunpack.c.h.b16 %v202
  %v766 = vunpack.c.l.b16 %v203
  %v767 = vunpack.c.h.b16 %v203
  %v768 = vunpack.c.l.b16 %v204
  %v769 = vunpack.c.h.b16 %v204
  %v770 = vunpack.c.l.b16 %v205
  %v771 = vunpack.c.h.b16 %v205
  %v772 = vunpack.c.l.b16 %v206
  %v773 = vunpack.c.h.b16 %v206
  %v774 = vunpack.c.l.b16 %v207
  %v775 = vunpack.c.h.b16 %v207
  %v776 = vunpack.c.l.b16 %v208
  %v777 = vunpack.c.h.b16 %v208
  %v778 = vunpack.c.l.b16 %v209
  %v779 = vunpack.c.h.b16 %v209
  %v780 = vunpack.c.l.b16 %v210
  %v781 = vunpack.c.h.b16 %v210
  %v782 = vunpack.c.l.b16 %v211
  %v783 = vunpack.c.h.b16 %v211
  %v784 = vunpack.c.l.b16 %v212
  %v785 = vunpack.c.h.b16 %v212
  %v786 = vunpack.c.l.b16 %v213
  %v787 = vunpack.c.h.b16 %v213
  %v788 = vunpack.c.l.b16 %v214
  %v789 = vunpack.c.h.b16 %v214
  %v790 = vunpack.c.l.b16 %v215
  %v791 = vunpack.c.h.b16 %v215
  %v792 = vunpack.c.l.b16 %v216
  %v793 = vunpack.c.h.b16 %v216
  %v794 = vunpack.c.l.b16 %v217
  %v795 = vunpack.c.h.b16 %v217
  %v796 = vunpack.c.l.b16 %v218
  %v797 = vunpack.c.h.b16 %v218
  %v798 = vunpack.c.l.b16 %v219
  %v799 = vunpack.c.h.b16 %v219
  %v800 = vunpack.c.l.b16 %v220
  %v801 = vunpack.c.h.b16 %v220
  %v802 = vunpack.c.l.b16 %v221
  %v803 = vunpack.c.h.b16 %v221
  %v804 = vunpack.c.l.b16 %v222
  %v805 = vunpack.c.h.b16 %v222
  %v806 = vunpack.c.l.b16 %v223
  %v807 = vunpack.c.h.b16 %v223
  %v808 = vunpack.c.l.b16 %v224
  %v809 = vunpack.c.h.b16 %v224
  %v810 = vunpack.c.l.b16 %v225
  %v811 = vunpack.c.h.b16 %v225
  %v812 = vunpack.c.l.b16 %v226
  %v813 = vunpack.c.h.b16 %v226
  %v814 = vunpack.c.l.b16 %v227
  %v815 = vunpack.c.h.b16 %v227
  %v816 = vunpack.c.l.b16 %v228
  %v817 = vunpack.c.h.b16 %v228
  %v818 = vunpack.c.l.b16 %v229
  %v819 = vunpack.c.h.b16 %v229
  %v820 = vunpack.c.l.b16 %v230
  %v821 = vunpack.c.h.b16 %v230
  %v822 = vunpack.c.l.b16 %v231
  %v823 = vunpack.c.h.b16 %v231
  %v824 = vunpack.c.l.b16 %v232
  %v825 = vunpack.c.h.b16 %v232
  %v826 = vunpack.c.l.b16 %v233
  %v827 = vunpack.c.h.b16 %v233
  %v828 = vunpack.c.l.b16 %v234
  %v829 = vunpack.c.h.b16 %v234
  %v830 = vunpack.c.l.b16 %v235
  %v831 = vunpack.c.h.b16 %v235
  %v832 = vunpack.c.l.b16 %v236
  %v833 = vunpack.c.h.b16 %v236
  %v834 = vunpack.c.l.b16 %v237
  %v835 = vunpack.c.h.b16 %v237
  %v836 = vunpack.c.l.b16 %v238
  %v837 = vunpack.c.h.b16 %v238
  %v838 = vunpack.c.l.b16 %v239
  %v839 = vunpack.c.h.b16 %v239
  %v840 = vunpack.c.l.b16 %v240
  %v841 = vunpack.c.h.b16 %v240
  %v842 = vunpack.c.l.b16 %v241
  %v843 = vunpack.c.h.b16 %v241
  %v844 = vunpack.c.l.b16 %v242
  %v845 = vunpack.c.h.b16 %v242
  %v846 = vunpack.c.l.b16 %v243
  %v847 = vunpack.c.h.b16 %v243
  %v848 = vunpack.c.l.b16 %v244
  %v849 = vunpack.c.h.b16 %v244
  %v850 = vunpack.c.l.b16 %v245
  %v851 = vunpack.c.h.b16 %v245
  %v852 = vunpack.c.l.b16 %v246
  %v853 = vunpack.c.h.b16 %v246
  %v854 = vunpack.c.l.b16 %v247
  %v855 = vunpack.c.h.b16 %v247
  %v856 = vunpack.c.l.b16 %v248
  %v857 = vunpack.c.h.b16 %v248
  %v858 = vunpack.c.l.b16 %v249
  %v859 = vunpack.c.h.b16 %v249
  %v860 = vpack.c.b16 %v472, %v468
  %v861 = vpack.c.b16 %v473, %v469
  %v862 = vpack.c.b16 %v474, %v470
  %v863 = vpack.c.b16 %v475, %v471
  %v864 = vpack.c.b16 %v480, %v476
  %v865 = vpack.c.b16 %v481, %v477
  %v866 = vpack.c.b16 %v482, %v478
  %v867 = vpack.c.b16 %v483, %v479
  %v868 = vpack.c.b16 %v488, %v484
  %v869 = vpack.c.b16 %v489, %v485
  %v870 = vpack.c.b16 %v490, %v486
  %v871 = vpack.c.b16 %v491, %v487
  %v872 = vpack.c.b16 %v496, %v492
  %v873 = vpack.c.b16 %v497, %v493
  %v874 = vpack.c.b16 %v498, %v494
  %v875 = vpack.c.b16 %v499, %v495
  %v876 = vpack.c.b16 %v504, %v500
  %v877 = vpack.c.b16 %v505, %v501
  %v878 = vpack.c.b16 %v506, %v502
  %v879 = vpack.c.b16 %v507, %v503
  %v880 = vpack.c.b16 %v512, %v508
  %v881 = vpack.c.b16 %v513, %v509
  %v882 = vpack.c.b16 %v514, %v510
  %v883 = vpack.c.b16 %v515, %v511
  %v884 = vpack.c.b16 %v520, %v516
  %v885 = vpack.c.b16 %v521, %v517
  %v886 = vpack.c.b16 %v522, %v518
  %v887 = vpack.c.b16 %v523, %v519
  %v888 = vpack.c.b16 %v528, %v524
  %v889 = vpack.c.b16 %v529, %v525
  %v890 = vpack.c.b16 %v530, %v526
  %v891 = vpack.c.b16 %v531, %v527
  %v892 = vpack.c.b16 %v536, %v532
  %v893 = vpack.c.b16 %v537, %v533
  %v894 = vpack.c.b16 %v538, %v534
  %v895 = vpack.c.b16 %v539, %v535
  %v896 = vpack.c.b16 %v544, %v540
  %v897 = vpack.c.b16 %v545, %v541
  %v898 = vpack.c.b16 %v546, %v542
  %v899 = vpack.c.b16 %v547, %v543
  %v900 = vpack.c.b16 %v552, %v548
  %v901 = vpack.c.b16 %v553, %v549
  %v902 = vpack.c.b16 %v554, %v550
  %v903 = vpack.c.b16 %v555, %v551
  %v904 = vpack.c.b16 %v560, %v556
  %v905 = vpack.c.b16 %v561, %v557
  %v906 = vpack.c.b16 %v562, %v558
  %v907 = vpack.c.b16 %v563, %v559
  %v908 = vpack.c.b16 %v568, %v564
  %v909 = vpack.c.b16 %v569, %v565
  %v910 = vpack.c.b16 %v570, %v566
  %v911 = vpack.c.b16 %v571, %v567
  %v912 = vpack.c.b16 %v576, %v572
  %v913 = vpack.c.b16 %v577, %v573
  %v914 = vpack.c.b16 %v578, %v574
  %v915 = vpack.c.b16 %v579, %v575
  %v916 = vpack.c.b16 %v584, %v580
  %v917 = vpack.c.b16 %v585, %v581
  %v918 = vpack.c.b16 %v586, %v582
  %v919 = vpack.c.b16 %v587, %v583
  %v920 = vpack.c.b16 %v592, %v588
  %v921 = vpack.c.b16 %v593, %v589
  %v922 = vpack.c.b16 %v594, %v590
  %v923 = vpack.c.b16 %v595, %v591
  %v924 = vpack.c.b16 %v600, %v596
  %v925 = vpack.c.b16 %v601, %v597
  %v926 = vpack.c.b16 %v602, %v598
  %v927 = vpack.c.b16 %v603, %v599
  %v928 = vpack.c.b16 %v608, %v604
  %v929 = vpack.c.b16 %v609, %v605
  %v930 = vpack.c.b16 %v610, %v606
  %v931 = vpack.c.b16 %v611, %v607
  %v932 = vpack.c.b16 %v616, %v612
  %v933 = vpack.c.b16 %v617, %v613
  %v934 = vpack.c.b16 %v618, %v614
  %v935 = vpack.c.b16 %v619, %v615
  %v936 = vpack.c.b16 %v624, %v620
  %v937 = vpack.c.b16 %v625, %v621
  %v938 = vpack.c.b16 %v626, %v622
  %v939 = vpack.c.b16 %v627, %v623
  %v940 = vpack.c.b16 %v632, %v628
  %v941 = vpack.c.b16 %v633, %v629
  %v942 = vpack.c.b16 %v634, %v630
  %v943 = vpack.c.b16 %v635, %v631
  %v944 = vpack.c.b16 %v640, %v636
  %v945 = vpack.c.b16 %v641, %v637
  %v946 = vpack.c.b16 %v642, %v638
  %v947 = vpack.c.b16 %v643, %v639
  %v948 = vpack.c.b16 %v648, %v644
  %v949 = vpack.c.b16 %v649, %v645
  %v950 = vpack.c.b16 %v650, %v646
  %v951 = vpack.c.b16 %v651, %v647
  %v952 = vpack.c.b16 %v656, %v652
  %v953 = vpack.c.b16 %v657, %v653
  %v954 = vpack.c.b16 %v658, %v654
  %v955 = vpack.c.b16 %v659, %v655
  %v956 = vpack.c.b16 %v664, %v660
  %v957 = vpack.c.b16 %v665, %v661
  %v958 = vpack.c.b16 %v666, %v662
  %v959 = vpack.c.b16 %v667, %v663
  %v960 = vpack.c.b16 %v672, %v668
  %v961 = vpack.c.b16 %v673, %v669
  %v962 = vpack.c.b16 %v674, %v670
  %v963 = vpack.c.b16 %v675, %v671
  %v964 = vpack.c.b16 %v680, %v676
  %v965 = vpack.c.b16 %v681, %v677
  %v966 = vpack.c.b16 %v682, %v678
  %v967 = vpack.c.b16 %v683, %v679
  %v968 = vpack.c.b16 %v688, %v684
  %v969 = vpack.c.b16 %v689, %v685
  %v970 = vpack.c.b16 %v690, %v686
  %v971 = vpack.c.b16 %v691, %v687
  %v972 = vpack.c.b16 %v696, %v692
  %v973 = vpack.c.b16 %v697, %v693
  %v974 = vpack.c.b16 %v698, %v694
  %v975 = vpack.c.b16 %v699, %v695
  %v976 = vpack.c.b16 %v704, %v700
  %v977 = vpack.c.b16 %v705, %v701
  %v978 = vpack.c.b16 %v706, %v702
  %v979 = vpack.c.b16 %v707, %v703
  %v980 = vpack.c.b16 %v712, %v708
  %v981 = vpack.c.b16 %v713, %v709
  %v982 = vpack.c.b16 %v714, %v710
  %v983 = vpack.c.b16 %v715, %v711
  %v984 = vpack.c.b16 %v720, %v716
  %v985 = vpack.c.b16 %v721, %v717
  %v986 = vpack.c.b16 %v722, %v718
  %v987 = vpack.c.b16 %v723, %v719
  %v988 = vpack.c.b16 %v728, %v724
  %v989 = vpack.c.b16 %v729, %v725
  %v990 = vpack.c.b16 %v730, %v726
  %v991 = vpack.c.b16 %v731, %v727
  %v992 = vpack.c.b16 %v736, %v732
  %v993 = vpack.c.b16 %v737, %v733
  %v994 = vpack.c.b16 %v738, %v734
  %v995 = vpack.c.b16 %v739, %v735
  %v996 = vpack.c.b16 %v744, %v740
  %v997 = vpack.c.b16 %v745, %v741
  %v998 = vpack.c.b16 %v746, %v742
  %v999 = vpack.c.b16 %v747, %v743
  %v1000 = vpack.c.b16 %v752, %v748
  %v1001 = vpack.c.b16 %v753, %v749
  %v1002 = vpack.c.b16 %v754, %v750
  %v1003 = vpack.c.b16 %v755, %v751
  %v1004 = vpack.c.b16 %v760, %v756
  %v1005 = vpack.c.b16 %v761, %v757
  %v1006 = vpack.c.b16 %v762, %v758
  %v1007 = vpack.c.b16 %v763, %v759
  %v1008 = vpack.c.b16 %v768, %v764
  %v1009 = vpack.c.b16 %v769, %v765
  %v1010 = vpack.c.b16 %v770, %v766
  %v1011 = vpack.c.b16 %v771, %v767
  %v1012 = vpack.c.b16 %v776, %v772
  %v1013 = vpack.c.b16 %v777, %v773
  %v1014 = vpack.c.b16 %v778, %v774
  %v1015 = vpack.c.b16 %v779, %v775
  %v1016 = vpack.c.b16 %v784, %v780
  %v1017 = vpack.c.b16 %v785, %v781
  %v1018 = vpack.c.b16 %v786, %v782
  %v1019 = vpack.c.b16 %v787, %v783
  %v1020 = vpack.c.b16 %v792, %v788
  %v1021 = vpack.c.b16 %v793, %v789
  %v1022 = vpack.c.b16 %v794, %v790
  %v1023 = vpack.c.b16 %v795, %v791
  %v1024 = vpack.c.b16 %v800, %v796
  %v1025 = vpack.c.b16 %v801, %v797
  %v1026 = vpack.c.b16 %v802, %v798
  %v1027 = vpack.c.b16 %v803, %v799
  %v1028 = vpack.c.b16 %v808, %v804
  %v1029 = vpack.c.b16 %v809, %v805
  %v1030 = vpack.c.b16 %v810, %v806
  %v1031 = vpack.c.b16 %v811, %v807
  %v1032 = vpack.c.b16 %v816, %v812
  %v1033 = vpack.c.b16 %v817, %v813
  %v1034 = vpack.c.b16 %v818, %v814
  %v1035 = vpack.c.b16 %v819, %v815
  %v1036 = vpack.c.b16 %v824, %v820
  %v1037 = vpack.c.b16 %v825, %v821
  %v1038 = vpack.c.b16 %v826, %v822
  %v1039 = vpack.c.b16 %v827, %v823
  %v1040 = vpack.c.b16 %v832, %v828
  %v1041 = vpack.c.b16 %v833, %v829
  %v1042 = vpack.c.b16 %v834, %v830
  %v1043 = vpack.c.b16 %v835, %v831
  %v1044 = vpack.c.b16 %v840, %v836
  %v1045 = vpack.c.b16 %v841, %v837
  %v1046 = vpack.c.b16 %v842, %v838
  %v1047 = vpack.c.b16 %v843, %v839
  %v1048 = vpack.c.b16 %v848, %v844
  %v1049 = vpack.c.b16 %v849, %v845
  %v1050 = vpack.c.b16 %v850, %v846
  %v1051 = vpack.c.b16 %v851, %v847
  %v1052 = vpack.c.b16 %v856, %v852
  %v1053 = vpack.c.b16 %v857, %v853
  %v1054 = vpack.c.b16 %v858, %v854
  %v1055 = vpack.c.b16 %v859, %v855
  %vm1252 = vcmask 130048
  %v1254 = vsel %vm1252, %v53, 0
  %1256 = vmatprep.subr.bf16.mxu0 %v861
  %1257 = vmatpush1.bf16.msra.mxu0 %v860
  %1258 = vmatprep.subr.bf16.mxu0 %v865
  %1259 = vmatpush1.bf16.msra.mxu0 %v864
  %1260 = vmatprep.subr.bf16.mxu0 %v869
  %1261 = vmatpush1.bf16.msra.mxu0 %v868
  %1262 = vmatprep.subr.bf16.mxu0 %v873
  %1263 = vmatpush1.bf16.msra.mxu0 %v872
  %1264 = vmatprep.subr.bf16.mxu0 %v877
  %1265 = vmatpush1.bf16.msra.mxu0 %v876
  %1266 = vmatprep.subr.bf16.mxu0 %v881
  %1267 = vmatpush1.bf16.msra.mxu0 %v880
  %1268 = vmatprep.subr.bf16.mxu0 %v885
  %1269 = vmatpush1.bf16.msra.mxu0 %v884
  %1270 = vmatprep.subr.bf16.mxu0 %v889
  %1271 = vmatpush1.bf16.msra.mxu0 %v888
  %1272 = vmatprep.subr.bf16.mxu0 %v893
  %1273 = vmatpush1.bf16.msra.mxu0 %v892
  %1274 = vmatprep.subr.bf16.mxu0 %v897
  %1275 = vmatpush1.bf16.msra.mxu0 %v896
  %1276 = vmatprep.subr.bf16.mxu0 %v901
  %1277 = vmatpush1.bf16.msra.mxu0 %v900
  %1278 = vmatprep.subr.bf16.mxu0 %v905
  %1279 = vmatpush1.bf16.msra.mxu0 %v904
  %1280 = vmatprep.subr.bf16.mxu0 %v909
  %1281 = vmatpush1.bf16.msra.mxu0 %v908
  %1282 = vmatprep.subr.bf16.mxu0 %v913
  %1283 = vmatpush1.bf16.msra.mxu0 %v912
  %1284 = vmatprep.subr.bf16.mxu0 %v917
  %1285 = vmatpush1.bf16.msra.mxu0 %v916
  %1286 = vmatprep.subr.bf16.mxu0 %v921
  %1287 = vmatpush1.bf16.msra.mxu0 %v920
  %1288 = vmatprep.mubr.bf16.mxu0 %v48
  %1289 = vmatmul.mubr.bf16.gmra.mrb[0].mxu0 %v47
  %v1290 = vpop.f32.mrb[0].mxu0
  %v1291 = vadd.f32 %v255, %v1290
  %v1292 = vpop.f32.mrb[0].mxu0
  %v1293 = vadd.f32 %v259, %v1292
  %v1294 = vpop.f32.mrb[0].mxu0
  %v1295 = vadd.f32 %v255, %v1294
  %v1296 = vpop.f32.mrb[0].mxu0
  %v1297 = vadd.f32 %v259, %v1296
  %1298 = vdwg.mxu0
  %1299 = vmatprep.subr.bf16.mxu0 %v925
  %1300 = vmatpush1.bf16.msra.mxu0 %v924
  %1301 = vmatprep.subr.bf16.mxu0 %v929
  %1302 = vmatpush1.bf16.msra.mxu0 %v928
  %1303 = vmatprep.subr.bf16.mxu0 %v933
  %1304 = vmatpush1.bf16.msra.mxu0 %v932
  %1305 = vmatprep.subr.bf16.mxu0 %v937
  %1306 = vmatpush1.bf16.msra.mxu0 %v936
  %1307 = vmatprep.subr.bf16.mxu0 %v941
  %1308 = vmatpush1.bf16.msra.mxu0 %v940
  %1309 = vmatprep.subr.bf16.mxu0 %v945
  %1310 = vmatpush1.bf16.msra.mxu0 %v944
  %1311 = vmatprep.subr.bf16.mxu0 %v949
  %1312 = vmatpush1.bf16.msra.mxu0 %v948
  %1313 = vmatprep.subr.bf16.mxu0 %v953
  %1314 = vmatpush1.bf16.msra.mxu0 %v952
  %1315 = vmatprep.subr.bf16.mxu0 %v957
  %1316 = vmatpush1.bf16.msra.mxu0 %v956
  %1317 = vmatprep.subr.bf16.mxu0 %v961
  %1318 = vmatpush1.bf16.msra.mxu0 %v960
  %1319 = vmatprep.subr.bf16.mxu0 %v965
  %1320 = vmatpush1.bf16.msra.mxu0 %v964
  %1321 = vmatprep.subr.bf16.mxu0 %v969
  %1322 = vmatpush1.bf16.msra.mxu0 %v968
  %1323 = vmatprep.subr.bf16.mxu0 %v973
  %1324 = vmatpush1.bf16.msra.mxu0 %v972
  %1325 = vmatprep.subr.bf16.mxu0 %v977
  %1326 = vmatpush1.bf16.msra.mxu0 %v976
  %1327 = vmatprep.subr.bf16.mxu0 %v981
  %1328 = vmatpush1.bf16.msra.mxu0 %v980
  %1329 = vmatprep.subr.bf16.mxu0 %v985
  %1330 = vmatpush1.bf16.msra.mxu0 %v984
  %1331 = vmatprep.mubr.bf16.mxu0 %v50
  %1332 = vmatmul.mubr.bf16.gmra.mrb[0].mxu0 %v49
  %v1333 = vpop.f32.mrb[0].mxu0
  %v1334 = vadd.f32 %v1291, %v1333
  %v1335 = vpop.f32.mrb[0].mxu0
  %v1336 = vadd.f32 %v1293, %v1335
  %v1337 = vpop.f32.mrb[0].mxu0
  %v1338 = vadd.f32 %v1295, %v1337
  %v1339 = vpop.f32.mrb[0].mxu0
  %v1340 = vadd.f32 %v1297, %v1339
  %1341 = vdwg.mxu0
  %1342 = vmatprep.subr.bf16.mxu0 %v989
  %1343 = vmatpush1.bf16.msra.mxu0 %v988
  %1344 = vmatprep.subr.bf16.mxu0 %v993
  %1345 = vmatpush1.bf16.msra.mxu0 %v992
  %1346 = vmatprep.subr.bf16.mxu0 %v997
  %1347 = vmatpush1.bf16.msra.mxu0 %v996
  %1348 = vmatprep.subr.bf16.mxu0 %v1001
  %1349 = vmatpush1.bf16.msra.mxu0 %v1000
  %1350 = vmatprep.subr.bf16.mxu0 %v1005
  %1351 = vmatpush1.bf16.msra.mxu0 %v1004
  %1352 = vmatprep.subr.bf16.mxu0 %v1009
  %1353 = vmatpush1.bf16.msra.mxu0 %v1008
  %1354 = vmatprep.subr.bf16.mxu0 %v1013
  %1355 = vmatpush1.bf16.msra.mxu0 %v1012
  %1356 = vmatprep.subr.bf16.mxu0 %v1017
  %1357 = vmatpush1.bf16.msra.mxu0 %v1016
  %1358 = vmatprep.subr.bf16.mxu0 %v1021
  %1359 = vmatpush1.bf16.msra.mxu0 %v1020
  %1360 = vmatprep.subr.bf16.mxu0 %v1025
  %1361 = vmatpush1.bf16.msra.mxu0 %v1024
  %1362 = vmatprep.subr.bf16.mxu0 %v1029
  %1363 = vmatpush1.bf16.msra.mxu0 %v1028
  %1364 = vmatprep.subr.bf16.mxu0 %v1033
  %1365 = vmatpush1.bf16.msra.mxu0 %v1032
  %1366 = vmatprep.subr.bf16.mxu0 %v1037
  %1367 = vmatpush1.bf16.msra.mxu0 %v1036
  %1368 = vmatprep.subr.bf16.mxu0 %v1041
  %1369 = vmatpush1.bf16.msra.mxu0 %v1040
  %1370 = vmatprep.subr.bf16.mxu0 %v1045
  %1371 = vmatpush1.bf16.msra.mxu0 %v1044
  %1372 = vmatprep.subr.bf16.mxu0 %v1049
  %1373 = vmatpush1.bf16.msra.mxu0 %v1048
  %1374 = vmatprep.mubr.bf16.mxu0 %v52
  %1375 = vmatmul.mubr.bf16.gmra.mrb[0].mxu0 %v51
  %v1376 = vpop.f32.mrb[0].mxu0
  %v1377 = vadd.f32 %v1334, %v1376
  %v1378 = vpop.f32.mrb[0].mxu0
  %v1379 = vadd.f32 %v1336, %v1378
  %v1380 = vpop.f32.mrb[0].mxu0
  %v1381 = vadd.f32 %v1338, %v1380
  %v1382 = vpop.f32.mrb[0].mxu0
  %v1383 = vadd.f32 %v1340, %v1382
  %1384 = vdwg.mxu0
  %1385 = vmatprep.subr.bf16.mxu0 %v1053
  %1386 = vmatpush1.bf16.msra.mxu0 %v1052
  %1387 = vmatprep.subr.bf16.mxu0 0
  %1388 = vmatpush1.bf16.msra.mxu0 0
  %1389 = vmatprep.subr.bf16.mxu0 0
  %1390 = vmatpush1.bf16.msra.mxu0 0
  %1391 = vmatprep.subr.bf16.mxu0 0
  %1392 = vmatpush1.bf16.msra.mxu0 0
  %1393 = vmatprep.subr.bf16.mxu0 0
  %1394 = vmatpush1.bf16.msra.mxu0 0
  %1395 = vmatprep.subr.bf16.mxu0 0
  %1396 = vmatpush1.bf16.msra.mxu0 0
  %1397 = vmatprep.subr.bf16.mxu0 0
  %1398 = vmatpush1.bf16.msra.mxu0 0
  %1399 = vmatprep.subr.bf16.mxu0 0
  %1400 = vmatpush1.bf16.msra.mxu0 0
  %1401 = vmatprep.subr.bf16.mxu0 0
  %1402 = vmatpush1.bf16.msra.mxu0 0
  %1403 = vmatprep.subr.bf16.mxu0 0
  %1404 = vmatpush1.bf16.msra.mxu0 0
  %1405 = vmatprep.subr.bf16.mxu0 0
  %1406 = vmatpush1.bf16.msra.mxu0 0
  %1407 = vmatprep.subr.bf16.mxu0 0
  %1408 = vmatpush1.bf16.msra.mxu0 0
  %1409 = vmatprep.subr.bf16.mxu0 0
  %1410 = vmatpush1.bf16.msra.mxu0 0
  %1411 = vmatprep.subr.bf16.mxu0 0
  %1412 = vmatpush1.bf16.msra.mxu0 0
  %1413 = vmatprep.subr.bf16.mxu0 0
  %1414 = vmatpush1.bf16.msra.mxu0 0
  %1415 = vmatprep.subr.bf16.mxu0 0
  %1416 = vmatpush1.bf16.msra.mxu0 0
  %1417 = vmatprep.mubr.bf16.mxu0 0
  %1418 = vmatmul.mubr.bf16.gmra.mrb[0].mxu0 %v1254
  %v1419 = vpop.f32.mrb[0].mxu0
  %v1420 = vadd.f32 %v1377, %v1419
  %v1421 = vpop.f32.mrb[0].mxu0
  %v1422 = vadd.f32 %v1379, %v1421
  %v1423 = vpop.f32.mrb[0].mxu0
  %v1424 = vadd.f32 %v1381, %v1423
  %v1425 = vpop.f32.mrb[0].mxu0
  %v1426 = vadd.f32 %v1383, %v1425
  %1427 = vdwg.mxu0
  %1428 = vmatprep.subr.bf16.mxu0 %v863
  %1429 = vmatpush1.bf16.msra.mxu0 %v862
  %1430 = vmatprep.subr.bf16.mxu0 %v867
  %1431 = vmatpush1.bf16.msra.mxu0 %v866
  %1432 = vmatprep.subr.bf16.mxu0 %v871
  %1433 = vmatpush1.bf16.msra.mxu0 %v870
  %1434 = vmatprep.subr.bf16.mxu0 %v875
  %1435 = vmatpush1.bf16.msra.mxu0 %v874
  %1436 = vmatprep.subr.bf16.mxu0 %v879
  %1437 = vmatpush1.bf16.msra.mxu0 %v878
  %1438 = vmatprep.subr.bf16.mxu0 %v883
  %1439 = vmatpush1.bf16.msra.mxu0 %v882
  %1440 = vmatprep.subr.bf16.mxu0 %v887
  %1441 = vmatpush1.bf16.msra.mxu0 %v886
  %1442 = vmatprep.subr.bf16.mxu0 %v891
  %1443 = vmatpush1.bf16.msra.mxu0 %v890
  %1444 = vmatprep.subr.bf16.mxu0 %v895
  %1445 = vmatpush1.bf16.msra.mxu0 %v894
  %1446 = vmatprep.subr.bf16.mxu0 %v899
  %1447 = vmatpush1.bf16.msra.mxu0 %v898
  %1448 = vmatprep.subr.bf16.mxu0 %v903
  %1449 = vmatpush1.bf16.msra.mxu0 %v902
  %1450 = vmatprep.subr.bf16.mxu0 %v907
  %1451 = vmatpush1.bf16.msra.mxu0 %v906
  %1452 = vmatprep.subr.bf16.mxu0 %v911
  %1453 = vmatpush1.bf16.msra.mxu0 %v910
  %1454 = vmatprep.subr.bf16.mxu0 %v915
  %1455 = vmatpush1.bf16.msra.mxu0 %v914
  %1456 = vmatprep.subr.bf16.mxu0 %v919
  %1457 = vmatpush1.bf16.msra.mxu0 %v918
  %1458 = vmatprep.subr.bf16.mxu0 %v923
  %1459 = vmatpush1.bf16.msra.mxu0 %v922
  %1460 = vmatprep.mubr.bf16.mxu0 %v48
  %1461 = vmatmul.mubr.bf16.gmra.mrb[0].mxu0 %v47
  %v1462 = vpop.f32.mrb[0].mxu0
  %v1463 = vadd.f32 %v263, %v1462
  %v1464 = vpop.f32.mrb[0].mxu0
  %v1465 = vadd.f32 %v267, %v1464
  %v1466 = vpop.f32.mrb[0].mxu0
  %v1467 = vadd.f32 %v263, %v1466
  %v1468 = vpop.f32.mrb[0].mxu0
  %v1469 = vadd.f32 %v267, %v1468
  %1470 = vdwg.mxu0
  %1471 = vmatprep.subr.bf16.mxu0 %v927
  %1472 = vmatpush1.bf16.msra.mxu0 %v926
  %1473 = vmatprep.subr.bf16.mxu0 %v931
  %1474 = vmatpush1.bf16.msra.mxu0 %v930
  %1475 = vmatprep.subr.bf16.mxu0 %v935
  %1476 = vmatpush1.bf16.msra.mxu0 %v934
  %1477 = vmatprep.subr.bf16.mxu0 %v939
  %1478 = vmatpush1.bf16.msra.mxu0 %v938
  %1479 = vmatprep.subr.bf16.mxu0 %v943
  %1480 = vmatpush1.bf16.msra.mxu0 %v942
  %1481 = vmatprep.subr.bf16.mxu0 %v947
  %1482 = vmatpush1.bf16.msra.mxu0 %v946
  %1483 = vmatprep.subr.bf16.mxu0 %v951
  %1484 = vmatpush1.bf16.msra.mxu0 %v950
  %1485 = vmatprep.subr.bf16.mxu0 %v955
  %1486 = vmatpush1.bf16.msra.mxu0 %v954
  %1487 = vmatprep.subr.bf16.mxu0 %v959
  %1488 = vmatpush1.bf16.msra.mxu0 %v958
  %1489 = vmatprep.subr.bf16.mxu0 %v963
  %1490 = vmatpush1.bf16.msra.mxu0 %v962
  %1491 = vmatprep.subr.bf16.mxu0 %v967
  %1492 = vmatpush1.bf16.msra.mxu0 %v966
  %1493 = vmatprep.subr.bf16.mxu0 %v971
  %1494 = vmatpush1.bf16.msra.mxu0 %v970
  %1495 = vmatprep.subr.bf16.mxu0 %v975
  %1496 = vmatpush1.bf16.msra.mxu0 %v974
  %1497 = vmatprep.subr.bf16.mxu0 %v979
  %1498 = vmatpush1.bf16.msra.mxu0 %v978
  %1499 = vmatprep.subr.bf16.mxu0 %v983
  %1500 = vmatpush1.bf16.msra.mxu0 %v982
  %1501 = vmatprep.subr.bf16.mxu0 %v987
  %1502 = vmatpush1.bf16.msra.mxu0 %v986
  %1503 = vmatprep.mubr.bf16.mxu0 %v50
  %1504 = vmatmul.mubr.bf16.gmra.mrb[0].mxu0 %v49
  %v1505 = vpop.f32.mrb[0].mxu0
  %v1506 = vadd.f32 %v1463, %v1505
  %v1507 = vpop.f32.mrb[0].mxu0
  %v1508 = vadd.f32 %v1465, %v1507
  %v1509 = vpop.f32.mrb[0].mxu0
  %v1510 = vadd.f32 %v1467, %v1509
  %v1511 = vpop.f32.mrb[0].mxu0
  %v1512 = vadd.f32 %v1469, %v1511
  %1513 = vdwg.mxu0
  %1514 = vmatprep.subr.bf16.mxu0 %v991
  %1515 = vmatpush1.bf16.msra.mxu0 %v990
  %1516 = vmatprep.subr.bf16.mxu0 %v995
  %1517 = vmatpush1.bf16.msra.mxu0 %v994
  %1518 = vmatprep.subr.bf16.mxu0 %v999
  %1519 = vmatpush1.bf16.msra.mxu0 %v998
  %1520 = vmatprep.subr.bf16.mxu0 %v1003
  %1521 = vmatpush1.bf16.msra.mxu0 %v1002
  %1522 = vmatprep.subr.bf16.mxu0 %v1007
  %1523 = vmatpush1.bf16.msra.mxu0 %v1006
  %1524 = vmatprep.subr.bf16.mxu0 %v1011
  %1525 = vmatpush1.bf16.msra.mxu0 %v1010
  %1526 = vmatprep.subr.bf16.mxu0 %v1015
  %1527 = vmatpush1.bf16.msra.mxu0 %v1014
  %1528 = vmatprep.subr.bf16.mxu0 %v1019
  %1529 = vmatpush1.bf16.msra.mxu0 %v1018
  %1530 = vmatprep.subr.bf16.mxu0 %v1023
  %1531 = vmatpush1.bf16.msra.mxu0 %v1022
  %1532 = vmatprep.subr.bf16.mxu0 %v1027
  %1533 = vmatpush1.bf16.msra.mxu0 %v1026
  %1534 = vmatprep.subr.bf16.mxu0 %v1031
  %1535 = vmatpush1.bf16.msra.mxu0 %v1030
  %1536 = vmatprep.subr.bf16.mxu0 %v1035
  %1537 = vmatpush1.bf16.msra.mxu0 %v1034
  %1538 = vmatprep.subr.bf16.mxu0 %v1039
  %1539 = vmatpush1.bf16.msra.mxu0 %v1038
  %1540 = vmatprep.subr.bf16.mxu0 %v1043
  %1541 = vmatpush1.bf16.msra.mxu0 %v1042
  %1542 = vmatprep.subr.bf16.mxu0 %v1047
  %1543 = vmatpush1.bf16.msra.mxu0 %v1046
  %1544 = vmatprep.subr.bf16.mxu0 %v1051
  %1545 = vmatpush1.bf16.msra.mxu0 %v1050
  %1546 = vmatprep.mubr.bf16.mxu0 %v52
  %1547 = vmatmul.mubr.bf16.gmra.mrb[0].mxu0 %v51
  %v1548 = vpop.f32.mrb[0].mxu0
  %v1549 = vadd.f32 %v1506, %v1548
  %v1550 = vpop.f32.mrb[0].mxu0
  %v1551 = vadd.f32 %v1508, %v1550
  %v1552 = vpop.f32.mrb[0].mxu0
  %v1553 = vadd.f32 %v1510, %v1552
  %v1554 = vpop.f32.mrb[0].mxu0
  %v1555 = vadd.f32 %v1512, %v1554
  %1556 = vdwg.mxu0
  %1557 = vmatprep.subr.bf16.mxu0 %v1055
  %1558 = vmatpush1.bf16.msra.mxu0 %v1054
  %1559 = vmatprep.subr.bf16.mxu0 0
  %1560 = vmatpush1.bf16.msra.mxu0 0
  %1561 = vmatprep.subr.bf16.mxu0 0
  %1562 = vmatpush1.bf16.msra.mxu0 0
  %1563 = vmatprep.subr.bf16.mxu0 0
  %1564 = vmatpush1.bf16.msra.mxu0 0
  %1565 = vmatprep.subr.bf16.mxu0 0
  %1566 = vmatpush1.bf16.msra.mxu0 0
  %1567 = vmatprep.subr.bf16.mxu0 0
  %1568 = vmatpush1.bf16.msra.mxu0 0
  %1569 = vmatprep.subr.bf16.mxu0 0
  %1570 = vmatpush1.bf16.msra.mxu0 0
  %1571 = vmatprep.subr.bf16.mxu0 0
  %1572 = vmatpush1.bf16.msra.mxu0 0
  %1573 = vmatprep.subr.bf16.mxu0 0
  %1574 = vmatpush1.bf16.msra.mxu0 0
  %1575 = vmatprep.subr.bf16.mxu0 0
  %1576 = vmatpush1.bf16.msra.mxu0 0
  %1577 = vmatprep.subr.bf16.mxu0 0
  %1578 = vmatpush1.bf16.msra.mxu0 0
  %1579 = vmatprep.subr.bf16.mxu0 0
  %1580 = vmatpush1.bf16.msra.mxu0 0
  %1581 = vmatprep.subr.bf16.mxu0 0
  %1582 = vmatpush1.bf16.msra.mxu0 0
  %1583 = vmatprep.subr.bf16.mxu0 0
  %1584 = vmatpush1.bf16.msra.mxu0 0
  %1585 = vmatprep.subr.bf16.mxu0 0
  %1586 = vmatpush1.bf16.msra.mxu0 0
  %1587 = vmatprep.subr.bf16.mxu0 0
  %1588 = vmatpush1.bf16.msra.mxu0 0
  %1589 = vmatprep.mubr.bf16.mxu0 0
  %1590 = vmatmul.mubr.bf16.gmra.mrb[0].mxu0 %v1254
  %v1591 = vpop.f32.mrb[0].mxu0
  %v1592 = vadd.f32 %v1549, %v1591
  %v1593 = vpop.f32.mrb[0].mxu0
  %v1594 = vadd.f32 %v1551, %v1593
  %v1595 = vpop.f32.mrb[0].mxu0
  %v1596 = vadd.f32 %v1553, %v1595
  %v1597 = vpop.f32.mrb[0].mxu0
  %v1598 = vadd.f32 %v1555, %v1597
  %1599 = vdwg.mxu0
  %v1600 = vmax.f32 %v1420, 0.0
  %v1601 = vmax.f32 %v1422, 0.0
  %v1602 = vmax.f32 %v1592, 0.0
  %v1603 = vmax.f32 %v1594, 0.0
  %v1604 = vmax.f32 %v1424, 0.0
  %v1605 = vmax.f32 %v1426, 0.0
  %v1606 = vmax.f32 %v1596, 0.0
  %v1607 = vmax.f32 %v1598, 0.0
  %v1608 = vpack.c.bf16 %v1604, %v1600
  %v1609 = vpack.c.bf16 %v1605, %v1601
  %v1610 = vpack.c.bf16 %v1606, %v1602
  %v1611 = vpack.c.bf16 %v1607, %v1603
  %v1612 = vld [vmem:[%s3] sm:$0xf]
  %v1613 = vld [vmem:[%s3 + $0x4] sm:$0xf]
  %v1614 = vld [vmem:[%s3 + $0x8] sm:$0xf]
  %v1615 = vld [vmem:[%s3 + $0xc] sm:$0xf]
  %v1616 = vld [vmem:[%s3 + $0x10] sm:$0xf]
  %v1617 = vld [vmem:[%s3 + $0x14] sm:$0xf]
  %v1618 = vld [vmem:[%s3 + $0x18] sm:$0xf]
  %v1619 = vld [vmem:[%s3 + $0x1c] sm:$0xf]
  %v1620 = vld [vmem:[%s3 + $0x20] sm:$0xf]
  %v1621 = vld [vmem:[%s3 + $0x24] sm:$0xf]
  %v1622 = vld [vmem:[%s3 + $0x28] sm:$0xf]
  %v1623 = vld [vmem:[%s3 + $0x2c] sm:$0xf]
  %v1624 = vld [vmem:[%s3 + $0x30] sm:$0xf]
  %v1625 = vld [vmem:[%s3 + $0x34] sm:$0xf]
  %v1626 = vld [vmem:[%s3 + $0x38] sm:$0xf]
  %v1627 = vld [vmem:[%s3 + $0x3c] sm:$0xf]
  %v1628 = vld [vmem:[%s3 + $0x40] sm:$0xf]
  %v1629 = vld [vmem:[%s3 + $0x44] sm:$0xf]
  %v1630 = vld [vmem:[%s3 + $0x48] sm:$0xf]
  %v1631 = vld [vmem:[%s3 + $0x4c] sm:$0xf]
  %v1632 = vld [vmem:[%s3 + $0x50] sm:$0xf]
  %v1633 = vld [vmem:[%s3 + $0x54] sm:$0xf]
  %v1634 = vld [vmem:[%s3 + $0x58] sm:$0xf]
  %v1635 = vld [vmem:[%s3 + $0x5c] sm:$0xf]
  %v1636 = vld [vmem:[%s3 + $0x60] sm:$0xf]
  %v1637 = vld [vmem:[%s3 + $0x64] sm:$0xf]
  %v1638 = vld [vmem:[%s3 + $0x68] sm:$0xf]
  %v1639 = vld [vmem:[%s3 + $0x6c] sm:$0xf]
  %v1640 = vld [vmem:[%s3 + $0x70] sm:$0xf]
  %v1641 = vld [vmem:[%s3 + $0x74] sm:$0xf]
  %v1642 = vld [vmem:[%s3 + $0x78] sm:$0xf]
  %v1643 = vld [vmem:[%s3 + $0x7c] sm:$0xf]
  %v1644 = vld [vmem:[%s3 + $0x80] sm:$0xf]
  %v1645 = vld [vmem:[%s3 + $0x84] sm:$0xf]
  %v1646 = vld [vmem:[%s3 + $0x88] sm:$0xf]
  %v1647 = vld [vmem:[%s3 + $0x8c] sm:$0xf]
  %v1648 = vld [vmem:[%s3 + $0x90] sm:$0xf]
  %v1649 = vld [vmem:[%s3 + $0x94] sm:$0xf]
  %v1650 = vld [vmem:[%s3 + $0x98] sm:$0xf]
  %v1651 = vld [vmem:[%s3 + $0x9c] sm:$0xf]
  %v1652 = vld [vmem:[%s3 + $0xa0] sm:$0xf]
  %v1653 = vld [vmem:[%s3 + $0xa4] sm:$0xf]
  %v1654 = vld [vmem:[%s3 + $0xa8] sm:$0xf]
  %v1655 = vld [vmem:[%s3 + $0xac] sm:$0xf]
  %v1656 = vld [vmem:[%s3 + $0xb0] sm:$0xf]
  %v1657 = vld [vmem:[%s3 + $0xb4] sm:$0xf]
  %v1658 = vld [vmem:[%s3 + $0xb8] sm:$0xf]
  %v1659 = vld [vmem:[%s3 + $0xbc] sm:$0xf]
  %v1660 = vld [vmem:[%s3 + $0xc0] sm:$0xf]
  %v1661 = vld [vmem:[%s3 + $0xc4] sm:$0xf]
  %v1662 = vld [vmem:[%s3 + $0xc8] sm:$0xf]
  %v1663 = vld [vmem:[%s3 + $0xcc] sm:$0xf]
  %v1664 = vld [vmem:[%s3 + $0xd0] sm:$0xf]
  %v1665 = vld [vmem:[%s3 + $0xd4] sm:$0xf]
  %v1666 = vld [vmem:[%s3 + $0xd8] sm:$0xf]
  %v1667 = vld [vmem:[%s3 + $0xdc] sm:$0xf]
  %v1668 = vld [vmem:[%s3 + $0xe0] sm:$0xf]
  %v1669 = vld [vmem:[%s3 + $0xe4] sm:$0xf]
  %v1670 = vld [vmem:[%s3 + $0xe8] sm:$0xf]
  %v1671 = vld [vmem:[%s3 + $0xec] sm:$0xf]
  %v1672 = vld [vmem:[%s3 + $0xf0] sm:$0xf]
  %v1673 = vld [vmem:[%s3 + $0xf4] sm:$0xf]
  %v1674 = vld [vmem:[%s3 + $0xf8] sm:$0xf]
  %v1675 = vld [vmem:[%s3 + $0xfc] sm:$0xf]
  %v1676 = vld [vmem:[%s4] sm:$0x1]
  %v1678 = vlaneseq
  %v1679 = vshrl.u32 %v1678, 7
  %v1680 = vsub.s32 0, %v1679
  %v1681 = vrot.slane %v1676, %v1680
  %v1747 = vunpack.c.l.b16 %v1612
  %v1748 = vunpack.c.l.b16 %v1613
  %v1749 = vunpack.c.l.b16 %v1614
  %v1750 = vunpack.c.l.b16 %v1615
  %v1751 = vunpack.c.l.b16 %v1616
  %v1752 = vunpack.c.l.b16 %v1617
  %v1753 = vunpack.c.l.b16 %v1618
  %v1754 = vunpack.c.l.b16 %v1619
  %v1755 = vunpack.c.l.b16 %v1620
  %v1756 = vunpack.c.l.b16 %v1621
  %v1757 = vunpack.c.l.b16 %v1622
  %v1758 = vunpack.c.l.b16 %v1623
  %v1759 = vunpack.c.l.b16 %v1624
  %v1760 = vunpack.c.l.b16 %v1625
  %v1761 = vunpack.c.l.b16 %v1626
  %v1762 = vunpack.c.l.b16 %v1627
  %v1763 = vunpack.c.l.b16 %v1628
  %v1764 = vunpack.c.l.b16 %v1629
  %v1765 = vunpack.c.l.b16 %v1630
  %v1766 = vunpack.c.l.b16 %v1631
  %v1767 = vunpack.c.l.b16 %v1632
  %v1768 = vunpack.c.l.b16 %v1633
  %v1769 = vunpack.c.l.b16 %v1634
  %v1770 = vunpack.c.l.b16 %v1635
  %v1771 = vunpack.c.l.b16 %v1636
  %v1772 = vunpack.c.l.b16 %v1637
  %v1773 = vunpack.c.l.b16 %v1638
  %v1774 = vunpack.c.l.b16 %v1639
  %v1775 = vunpack.c.l.b16 %v1640
  %v1776 = vunpack.c.l.b16 %v1641
  %v1777 = vunpack.c.l.b16 %v1642
  %v1778 = vunpack.c.l.b16 %v1643
  %v1779 = vunpack.c.l.b16 %v1644
  %v1780 = vunpack.c.l.b16 %v1645
  %v1781 = vunpack.c.l.b16 %v1646
  %v1782 = vunpack.c.l.b16 %v1647
  %v1783 = vunpack.c.l.b16 %v1648
  %v1784 = vunpack.c.l.b16 %v1649
  %v1785 = vunpack.c.l.b16 %v1650
  %v1786 = vunpack.c.l.b16 %v1651
  %v1787 = vunpack.c.l.b16 %v1652
  %v1788 = vunpack.c.l.b16 %v1653
  %v1789 = vunpack.c.l.b16 %v1654
  %v1790 = vunpack.c.l.b16 %v1655
  %v1791 = vunpack.c.l.b16 %v1656
  %v1792 = vunpack.c.l.b16 %v1657
  %v1793 = vunpack.c.l.b16 %v1658
  %v1794 = vunpack.c.l.b16 %v1659
  %v1795 = vunpack.c.l.b16 %v1660
  %v1796 = vunpack.c.l.b16 %v1661
  %v1797 = vunpack.c.l.b16 %v1662
  %v1798 = vunpack.c.l.b16 %v1663
  %v1799 = vunpack.c.l.b16 %v1664
  %v1800 = vunpack.c.l.b16 %v1665
  %v1801 = vunpack.c.l.b16 %v1666
  %v1802 = vunpack.c.l.b16 %v1667
  %v1803 = vunpack.c.l.b16 %v1668
  %v1804 = vunpack.c.l.b16 %v1669
  %v1805 = vunpack.c.l.b16 %v1670
  %v1806 = vunpack.c.l.b16 %v1671
  %v1807 = vunpack.c.l.b16 %v1672
  %v1808 = vunpack.c.l.b16 %v1673
  %v1809 = vunpack.c.l.b16 %v1674
  %v1810 = vunpack.c.l.b16 %v1675
  %v1811 = vpack.c.b16 %v1748, %v1747
  %v1812 = vpack.c.b16 %v1750, %v1749
  %v1813 = vpack.c.b16 %v1752, %v1751
  %v1814 = vpack.c.b16 %v1754, %v1753
  %v1815 = vpack.c.b16 %v1756, %v1755
  %v1816 = vpack.c.b16 %v1758, %v1757
  %v1817 = vpack.c.b16 %v1760, %v1759
  %v1818 = vpack.c.b16 %v1762, %v1761
  %v1819 = vpack.c.b16 %v1764, %v1763
  %v1820 = vpack.c.b16 %v1766, %v1765
  %v1821 = vpack.c.b16 %v1768, %v1767
  %v1822 = vpack.c.b16 %v1770, %v1769
  %v1823 = vpack.c.b16 %v1772, %v1771
  %v1824 = vpack.c.b16 %v1774, %v1773
  %v1825 = vpack.c.b16 %v1776, %v1775
  %v1826 = vpack.c.b16 %v1778, %v1777
  %v1827 = vpack.c.b16 %v1780, %v1779
  %v1828 = vpack.c.b16 %v1782, %v1781
  %v1829 = vpack.c.b16 %v1784, %v1783
  %v1830 = vpack.c.b16 %v1786, %v1785
  %v1831 = vpack.c.b16 %v1788, %v1787
  %v1832 = vpack.c.b16 %v1790, %v1789
  %v1833 = vpack.c.b16 %v1792, %v1791
  %v1834 = vpack.c.b16 %v1794, %v1793
  %v1835 = vpack.c.b16 %v1796, %v1795
  %v1836 = vpack.c.b16 %v1798, %v1797
  %v1837 = vpack.c.b16 %v1800, %v1799
  %v1838 = vpack.c.b16 %v1802, %v1801
  %v1839 = vpack.c.b16 %v1804, %v1803
  %v1840 = vpack.c.b16 %v1806, %v1805
  %v1841 = vpack.c.b16 %v1808, %v1807
  %v1842 = vpack.c.b16 %v1810, %v1809
  %1875 = vmatprep.subr.bf16.mxu0 0
  %1876 = vmatpush1.bf16.msra.mxu0 %v1811
  %1877 = vmatprep.subr.bf16.mxu0 0
  %1878 = vmatpush1.bf16.msra.mxu0 %v1812
  %1879 = vmatprep.subr.bf16.mxu0 0
  %1880 = vmatpush1.bf16.msra.mxu0 %v1813
  %1881 = vmatprep.subr.bf16.mxu0 0
  %1882 = vmatpush1.bf16.msra.mxu0 %v1814
  %1883 = vmatprep.subr.bf16.mxu0 0
  %1884 = vmatpush1.bf16.msra.mxu0 %v1815
  %1885 = vmatprep.subr.bf16.mxu0 0
  %1886 = vmatpush1.bf16.msra.mxu0 %v1816
  %1887 = vmatprep.subr.bf16.mxu0 0
  %1888 = vmatpush1.bf16.msra.mxu0 %v1817
  %1889 = vmatprep.subr.bf16.mxu0 0
  %1890 = vmatpush1.bf16.msra.mxu0 %v1818
  %1891 = vmatprep.subr.bf16.mxu0 0
  %1892 = vmatpush1.bf16.msra.mxu0 %v1819
  %1893 = vmatprep.subr.bf16.mxu0 0
  %1894 = vmatpush1.bf16.msra.mxu0 %v1820
  %1895 = vmatprep.subr.bf16.mxu0 0
  %1896 = vmatpush1.bf16.msra.mxu0 %v1821
  %1897 = vmatprep.subr.bf16.mxu0 0
  %1898 = vmatpush1.bf16.msra.mxu0 %v1822
  %1899 = vmatprep.subr.bf16.mxu0 0
  %1900 = vmatpush1.bf16.msra.mxu0 %v1823
  %1901 = vmatprep.subr.bf16.mxu0 0
  %1902 = vmatpush1.bf16.msra.mxu0 %v1824
  %1903 = vmatprep.subr.bf16.mxu0 0
  %1904 = vmatpush1.bf16.msra.mxu0 %v1825
  %1905 = vmatprep.subr.bf16.mxu0 0
  %1906 = vmatpush1.bf16.msra.mxu0 %v1826
  %1907 = vmatprep.mubr.bf16.mxu0 %v1609
  %1908 = vmatmul.mubr.bf16.gmra.mrb[0].mxu0 %v1608
  %v1909 = vpop.f32.mrb[0].mxu0
  %v1910 = vadd.f32 %v1681, %v1909
  %v1911 = vpop.f32.mrb[0].mxu0
  %v1912 = vpop.f32.mrb[0].mxu0
  %v1913 = vadd.f32 %v1681, %v1912
  %v1914 = vpop.f32.mrb[0].mxu0
  %1915 = vdwg.mxu0
  %1916 = vmatprep.subr.bf16.mxu0 0
  %1917 = vmatpush1.bf16.msra.mxu0 %v1827
  %1918 = vmatprep.subr.bf16.mxu0 0
  %1919 = vmatpush1.bf16.msra.mxu0 %v1828
  %1920 = vmatprep.subr.bf16.mxu0 0
  %1921 = vmatpush1.bf16.msra.mxu0 %v1829
  %1922 = vmatprep.subr.bf16.mxu0 0
  %1923 = vmatpush1.bf16.msra.mxu0 %v1830
  %1924 = vmatprep.subr.bf16.mxu0 0
  %1925 = vmatpush1.bf16.msra.mxu0 %v1831
  %1926 = vmatprep.subr.bf16.mxu0 0
  %1927 = vmatpush1.bf16.msra.mxu0 %v1832
  %1928 = vmatprep.subr.bf16.mxu0 0
  %1929 = vmatpush1.bf16.msra.mxu0 %v1833
  %1930 = vmatprep.subr.bf16.mxu0 0
  %1931 = vmatpush1.bf16.msra.mxu0 %v1834
  %1932 = vmatprep.subr.bf16.mxu0 0
  %1933 = vmatpush1.bf16.msra.mxu0 %v1835
  %1934 = vmatprep.subr.bf16.mxu0 0
  %1935 = vmatpush1.bf16.msra.mxu0 %v1836
  %1936 = vmatprep.subr.bf16.mxu0 0
  %1937 = vmatpush1.bf16.msra.mxu0 %v1837
  %1938 = vmatprep.subr.bf16.mxu0 0
  %1939 = vmatpush1.bf16.msra.mxu0 %v1838
  %1940 = vmatprep.subr.bf16.mxu0 0
  %1941 = vmatpush1.bf16.msra.mxu0 %v1839
  %1942 = vmatprep.subr.bf16.mxu0 0
  %1943 = vmatpush1.bf16.msra.mxu0 %v1840
  %1944 = vmatprep.subr.bf16.mxu0 0
  %1945 = vmatpush1.bf16.msra.mxu0 %v1841
  %1946 = vmatprep.subr.bf16.mxu0 0
  %1947 = vmatpush1.bf16.msra.mxu0 %v1842
  %1948 = vmatprep.mubr.bf16.mxu0 %v1611
  %1949 = vmatmul.mubr.bf16.gmra.mrb[0].mxu0 %v1610
  %v1950 = vpop.f32.mrb[0].mxu0
  %v1951 = vadd.f32 %v1910, %v1950
  %v1952 = vpop.f32.mrb[0].mxu0
  %v1953 = vpop.f32.mrb[0].mxu0
  %v1954 = vadd.f32 %v1913, %v1953
  %v1955 = vpop.f32.mrb[0].mxu0
  %1956 = vdwg.mxu0
  %v1957 = vmax.f32 %v1951, 0.0
  %v1958 = vmax.f32 %v1954, 0.0
  %v1959 = vpack.c.bf16 %v1958, %v1957
  %v1960 = vld [vmem:[%s5] sm:$0xff]
  %v1961 = vld [vmem:[%s5 + $0x8] sm:$0xff]
  %v1962 = vld [vmem:[%s5 + $0x10] sm:$0xff]
  %v1963 = vld [vmem:[%s5 + $0x18] sm:$0xff]
  %v1964 = vld [vmem:[%s5 + $0x20] sm:$0xff]
  %v1965 = vld [vmem:[%s5 + $0x28] sm:$0xff]
  %v1966 = vld [vmem:[%s5 + $0x30] sm:$0xff]
  %v1967 = vld [vmem:[%s5 + $0x38] sm:$0xff]
  %v1968 = vld [vmem:[%s5 + $0x40] sm:$0xff]
  %v1969 = vld [vmem:[%s5 + $0x48] sm:$0xff]
  %v1970 = vld [vmem:[%s5 + $0x50] sm:$0xff]
  %v1971 = vld [vmem:[%s5 + $0x58] sm:$0xff]
  %v1972 = vld [vmem:[%s5 + $0x60] sm:$0xff]
  %v1973 = vld [vmem:[%s5 + $0x68] sm:$0xff]
  %v1974 = vld [vmem:[%s5 + $0x70] sm:$0xff]
  %v1975 = vld [vmem:[%s5 + $0x78] sm:$0xff]
  %v1976 = vld [vmem:[%s5 + $0x80] sm:$0xff]
  %v1977 = vld [vmem:[%s5 + $0x88] sm:$0xff]
  %v1978 = vld [vmem:[%s5 + $0x90] sm:$0xff]
  %v1979 = vld [vmem:[%s5 + $0x98] sm:$0xff]
  %v1980 = vld [vmem:[%s5 + $0xa0] sm:$0xff]
  %v1981 = vld [vmem:[%s5 + $0xa8] sm:$0xff]
  %v1982 = vld [vmem:[%s5 + $0xb0] sm:$0xff]
  %v1983 = vld [vmem:[%s5 + $0xb8] sm:$0xff]
  %v1984 = vld [vmem:[%s5 + $0xc0] sm:$0xff]
  %v1985 = vld [vmem:[%s5 + $0xc8] sm:$0xff]
  %v1986 = vld [vmem:[%s5 + $0xd0] sm:$0xff]
  %v1987 = vld [vmem:[%s5 + $0xd8] sm:$0xff]
  %v1988 = vld [vmem:[%s5 + $0xe0] sm:$0xff]
  %v1989 = vld [vmem:[%s5 + $0xe8] sm:$0xff]
  %v1990 = vld [vmem:[%s5 + $0xf0] sm:$0xff]
  %v1991 = vld [vmem:[%s5 + $0xf8] sm:$0xff]
  %v1992 = vld [vmem:[%s6] sm:$0xf]
  %v1994 = vlaneseq
  %v1995 = vshrl.u32 %v1994, 7
  %v1996 = vsub.s32 0, %v1995
  %v1997 = vrot.slane %v1992, %v1996
  %v1998 = vlaneseq
  %v1999 = vshrl.u32 %v1998, 7
  %v2000 = vsub.s32 1, %v1999
  %v2001 = vrot.slane %v1992, %v2000
  %v2002 = vlaneseq
  %v2003 = vshrl.u32 %v2002, 7
  %v2004 = vsub.s32 2, %v2003
  %v2005 = vrot.slane %v1992, %v2004
  %v2006 = vlaneseq
  %v2007 = vshrl.u32 %v2006, 7
  %v2008 = vsub.s32 3, %v2007
  %v2009 = vrot.slane %v1992, %v2008
  %v2046 = vunpack.c.l.b16 %v1960
  %v2047 = vunpack.c.h.b16 %v1960
  %v2048 = vunpack.c.l.b16 %v1961
  %v2049 = vunpack.c.h.b16 %v1961
  %v2050 = vunpack.c.l.b16 %v1962
  %v2051 = vunpack.c.h.b16 %v1962
  %v2052 = vunpack.c.l.b16 %v1963
  %v2053 = vunpack.c.h.b16 %v1963
  %v2054 = vunpack.c.l.b16 %v1964
  %v2055 = vunpack.c.h.b16 %v1964
  %v2056 = vunpack.c.l.b16 %v1965
  %v2057 = vunpack.c.h.b16 %v1965
  %v2058 = vunpack.c.l.b16 %v1966
  %v2059 = vunpack.c.h.b16 %v1966
  %v2060 = vunpack.c.l.b16 %v1967
  %v2061 = vunpack.c.h.b16 %v1967
  %v2062 = vunpack.c.l.b16 %v1968
  %v2063 = vunpack.c.h.b16 %v1968
  %v2064 = vunpack.c.l.b16 %v1969
  %v2065 = vunpack.c.h.b16 %v1969
  %v2066 = vunpack.c.l.b16 %v1970
  %v2067 = vunpack.c.h.b16 %v1970
  %v2068 = vunpack.c.l.b16 %v1971
  %v2069 = vunpack.c.h.b16 %v1971
  %v2070 = vunpack.c.l.b16 %v1972
  %v2071 = vunpack.c.h.b16 %v1972
  %v2072 = vunpack.c.l.b16 %v1973
  %v2073 = vunpack.c.h.b16 %v1973
  %v2074 = vunpack.c.l.b16 %v1974
  %v2075 = vunpack.c.h.b16 %v1974
  %v2076 = vunpack.c.l.b16 %v1975
  %v2077 = vunpack.c.h.b16 %v1975
  %v2078 = vunpack.c.l.b16 %v1976
  %v2079 = vunpack.c.h.b16 %v1976
  %v2080 = vunpack.c.l.b16 %v1977
  %v2081 = vunpack.c.h.b16 %v1977
  %v2082 = vunpack.c.l.b16 %v1978
  %v2083 = vunpack.c.h.b16 %v1978
  %v2084 = vunpack.c.l.b16 %v1979
  %v2085 = vunpack.c.h.b16 %v1979
  %v2086 = vunpack.c.l.b16 %v1980
  %v2087 = vunpack.c.h.b16 %v1980
  %v2088 = vunpack.c.l.b16 %v1981
  %v2089 = vunpack.c.h.b16 %v1981
  %v2090 = vunpack.c.l.b16 %v1982
  %v2091 = vunpack.c.h.b16 %v1982
  %v2092 = vunpack.c.l.b16 %v1983
  %v2093 = vunpack.c.h.b16 %v1983
  %v2094 = vunpack.c.l.b16 %v1984
  %v2095 = vunpack.c.h.b16 %v1984
  %v2096 = vunpack.c.l.b16 %v1985
  %v2097 = vunpack.c.h.b16 %v1985
  %v2098 = vunpack.c.l.b16 %v1986
  %v2099 = vunpack.c.h.b16 %v1986
  %v2100 = vunpack.c.l.b16 %v1987
  %v2101 = vunpack.c.h.b16 %v1987
  %v2102 = vunpack.c.l.b16 %v1988
  %v2103 = vunpack.c.h.b16 %v1988
  %v2104 = vunpack.c.l.b16 %v1989
  %v2105 = vunpack.c.h.b16 %v1989
  %v2106 = vunpack.c.l.b16 %v1990
  %v2107 = vunpack.c.h.b16 %v1990
  %v2108 = vunpack.c.l.b16 %v1991
  %v2109 = vunpack.c.h.b16 %v1991
  %v2110 = vpack.c.b16 %v2050, %v2046
  %v2111 = vpack.c.b16 %v2051, %v2047
  %v2112 = vpack.c.b16 %v2052, %v2048
  %v2113 = vpack.c.b16 %v2053, %v2049
  %v2114 = vpack.c.b16 %v2058, %v2054
  %v2115 = vpack.c.b16 %v2059, %v2055
  %v2116 = vpack.c.b16 %v2060, %v2056
  %v2117 = vpack.c.b16 %v2061, %v2057
  %v2118 = vpack.c.b16 %v2066, %v2062
  %v2119 = vpack.c.b16 %v2067, %v2063
  %v2120 = vpack.c.b16 %v2068, %v2064
  %v2121 = vpack.c.b16 %v2069, %v2065
  %v2122 = vpack.c.b16 %v2074, %v2070
  %v2123 = vpack.c.b16 %v2075, %v2071
  %v2124 = vpack.c.b16 %v2076, %v2072
  %v2125 = vpack.c.b16 %v2077, %v2073
  %v2126 = vpack.c.b16 %v2082, %v2078
  %v2127 = vpack.c.b16 %v2083, %v2079
  %v2128 = vpack.c.b16 %v2084, %v2080
  %v2129 = vpack.c.b16 %v2085, %v2081
  %v2130 = vpack.c.b16 %v2090, %v2086
  %v2131 = vpack.c.b16 %v2091, %v2087
  %v2132 = vpack.c.b16 %v2092, %v2088
  %v2133 = vpack.c.b16 %v2093, %v2089
  %v2134 = vpack.c.b16 %v2098, %v2094
  %v2135 = vpack.c.b16 %v2099, %v2095
  %v2136 = vpack.c.b16 %v2100, %v2096
  %v2137 = vpack.c.b16 %v2101, %v2097
  %v2138 = vpack.c.b16 %v2106, %v2102
  %v2139 = vpack.c.b16 %v2107, %v2103
  %v2140 = vpack.c.b16 %v2108, %v2104
  %v2141 = vpack.c.b16 %v2109, %v2105
  %2174 = vmatprep.subr.bf16.mxu0 %v2111
  %2175 = vmatpush1.bf16.msra.mxu0 %v2110
  %2176 = vmatprep.subr.bf16.mxu0 %v2115
  %2177 = vmatpush1.bf16.msra.mxu0 %v2114
  %2178 = vmatprep.subr.bf16.mxu0 %v2119
  %2179 = vmatpush1.bf16.msra.mxu0 %v2118
  %2180 = vmatprep.subr.bf16.mxu0 %v2123
  %2181 = vmatpush1.bf16.msra.mxu0 %v2122
  %2182 = vmatprep.subr.bf16.mxu0 %v2127
  %2183 = vmatpush1.bf16.msra.mxu0 %v2126
  %2184 = vmatprep.subr.bf16.mxu0 %v2131
  %2185 = vmatpush1.bf16.msra.mxu0 %v2130
  %2186 = vmatprep.subr.bf16.mxu0 %v2135
  %2187 = vmatpush1.bf16.msra.mxu0 %v2134
  %2188 = vmatprep.subr.bf16.mxu0 %v2139
  %2189 = vmatpush1.bf16.msra.mxu0 %v2138
  %2190 = vmatprep.subr.bf16.mxu0 0
  %2191 = vmatpush1.bf16.msra.mxu0 0
  %2192 = vmatprep.subr.bf16.mxu0 0
  %2193 = vmatpush1.bf16.msra.mxu0 0
  %2194 = vmatprep.subr.bf16.mxu0 0
  %2195 = vmatpush1.bf16.msra.mxu0 0
  %2196 = vmatprep.subr.bf16.mxu0 0
  %2197 = vmatpush1.bf16.msra.mxu0 0
  %2198 = vmatprep.subr.bf16.mxu0 0
  %2199 = vmatpush1.bf16.msra.mxu0 0
  %2200 = vmatprep.subr.bf16.mxu0 0
  %2201 = vmatpush1.bf16.msra.mxu0 0
  %2202 = vmatprep.subr.bf16.mxu0 0
  %2203 = vmatpush1.bf16.msra.mxu0 0
  %2204 = vmatprep.subr.bf16.mxu0 0
  %2205 = vmatpush1.bf16.msra.mxu0 0
  %2206 = vmatprep.mubr.bf16.mxu0 0
  %2207 = vmatmul.mubr.bf16.gmra.mrb[0].mxu0 %v1959
  %v2208 = vpop.f32.mrb[0].mxu0
  %v2209 = vadd.f32 %v1997, %v2208
  %v2210 = vpop.f32.mrb[0].mxu0
  %v2211 = vadd.f32 %v2001, %v2210
  %v2212 = vpop.f32.mrb[0].mxu0
  %v2213 = vadd.f32 %v1997, %v2212
  %v2214 = vpop.f32.mrb[0].mxu0
  %v2215 = vadd.f32 %v2001, %v2214
  %2216 = vdwg.mxu0
  %2217 = vmatprep.subr.bf16.mxu0 %v2113
  %2218 = vmatpush1.bf16.msra.mxu0 %v2112
  %2219 = vmatprep.subr.bf16.mxu0 %v2117
  %2220 = vmatpush1.bf16.msra.mxu0 %v2116
  %2221 = vmatprep.subr.bf16.mxu0 %v2121
  %2222 = vmatpush1.bf16.msra.mxu0 %v2120
  %2223 = vmatprep.subr.bf16.mxu0 %v2125
  %2224 = vmatpush1.bf16.msra.mxu0 %v2124
  %2225 = vmatprep.subr.bf16.mxu0 %v2129
  %2226 = vmatpush1.bf16.msra.mxu0 %v2128
  %2227 = vmatprep.subr.bf16.mxu0 %v2133
  %2228 = vmatpush1.bf16.msra.mxu0 %v2132
  %2229 = vmatprep.subr.bf16.mxu0 %v2137
  %2230 = vmatpush1.bf16.msra.mxu0 %v2136
  %2231 = vmatprep.subr.bf16.mxu0 %v2141
  %2232 = vmatpush1.bf16.msra.mxu0 %v2140
  %2233 = vmatprep.subr.bf16.mxu0 0
  %2234 = vmatpush1.bf16.msra.mxu0 0
  %2235 = vmatprep.subr.bf16.mxu0 0
  %2236 = vmatpush1.bf16.msra.mxu0 0
  %2237 = vmatprep.subr.bf16.mxu0 0
  %2238 = vmatpush1.bf16.msra.mxu0 0
  %2239 = vmatprep.subr.bf16.mxu0 0
  %2240 = vmatpush1.bf16.msra.mxu0 0
  %2241 = vmatprep.subr.bf16.mxu0 0
  %2242 = vmatpush1.bf16.msra.mxu0 0
  %2243 = vmatprep.subr.bf16.mxu0 0
  %2244 = vmatpush1.bf16.msra.mxu0 0
  %2245 = vmatprep.subr.bf16.mxu0 0
  %2246 = vmatpush1.bf16.msra.mxu0 0
  %2247 = vmatprep.subr.bf16.mxu0 0
  %2248 = vmatpush1.bf16.msra.mxu0 0
  %2249 = vmatprep.mubr.bf16.mxu0 0
  %2250 = vmatmul.mubr.bf16.gmra.mrb[0].mxu0 %v1959
  %v2251 = vpop.f32.mrb[0].mxu0
  %v2252 = vadd.f32 %v2005, %v2251
  %v2253 = vpop.f32.mrb[0].mxu0
  %v2254 = vadd.f32 %v2009, %v2253
  %v2255 = vpop.f32.mrb[0].mxu0
  %v2256 = vadd.f32 %v2005, %v2255
  %v2257 = vpop.f32.mrb[0].mxu0
  %v2258 = vadd.f32 %v2009, %v2257
  %2259 = vdwg.mxu0
  %v2260 = vmax.f32 %v2209, 0.0
  %v2261 = vmax.f32 %v2211, 0.0
  %v2262 = vmax.f32 %v2252, 0.0
  %v2263 = vmax.f32 %v2254, 0.0
  %v2264 = vmax.f32 %v2213, 0.0
  %v2265 = vmax.f32 %v2215, 0.0
  %v2266 = vmax.f32 %v2256, 0.0
  %v2267 = vmax.f32 %v2258, 0.0
  %v2268 = vpack.c.bf16 %v2264, %v2260
  %v2269 = vpack.c.bf16 %v2265, %v2261
  %v2270 = vpack.c.bf16 %v2266, %v2262
  %v2271 = vpack.c.bf16 %v2267, %v2263
  %v2272 = vld [vmem:[%s7] sm:$0xf]
  %v2273 = vld [vmem:[%s7 + $0x4] sm:$0xf]
  %v2274 = vld [vmem:[%s7 + $0x8] sm:$0xf]
  %v2275 = vld [vmem:[%s7 + $0xc] sm:$0xf]
  %v2276 = vld [vmem:[%s7 + $0x10] sm:$0xf]
  %v2277 = vld [vmem:[%s7 + $0x14] sm:$0xf]
  %v2278 = vld [vmem:[%s7 + $0x18] sm:$0xf]
  %v2279 = vld [vmem:[%s7 + $0x1c] sm:$0xf]
  %v2280 = vld [vmem:[%s7 + $0x20] sm:$0xf]
  %v2281 = vld [vmem:[%s7 + $0x24] sm:$0xf]
  %v2282 = vld [vmem:[%s7 + $0x28] sm:$0xf]
  %v2283 = vld [vmem:[%s7 + $0x2c] sm:$0xf]
  %v2284 = vld [vmem:[%s7 + $0x30] sm:$0xf]
  %v2285 = vld [vmem:[%s7 + $0x34] sm:$0xf]
  %v2286 = vld [vmem:[%s7 + $0x38] sm:$0xf]
  %v2287 = vld [vmem:[%s7 + $0x3c] sm:$0xf]
  %v2288 = vld [vmem:[%s7 + $0x40] sm:$0xf]
  %v2289 = vld [vmem:[%s7 + $0x44] sm:$0xf]
  %v2290 = vld [vmem:[%s7 + $0x48] sm:$0xf]
  %v2291 = vld [vmem:[%s7 + $0x4c] sm:$0xf]
  %v2292 = vld [vmem:[%s7 + $0x50] sm:$0xf]
  %v2293 = vld [vmem:[%s7 + $0x54] sm:$0xf]
  %v2294 = vld [vmem:[%s7 + $0x58] sm:$0xf]
  %v2295 = vld [vmem:[%s7 + $0x5c] sm:$0xf]
  %v2296 = vld [vmem:[%s7 + $0x60] sm:$0xf]
  %v2297 = vld [vmem:[%s7 + $0x64] sm:$0xf]
  %v2298 = vld [vmem:[%s7 + $0x68] sm:$0xf]
  %v2299 = vld [vmem:[%s7 + $0x6c] sm:$0xf]
  %v2300 = vld [vmem:[%s7 + $0x70] sm:$0xf]
  %v2301 = vld [vmem:[%s7 + $0x74] sm:$0xf]
  %v2302 = vld [vmem:[%s7 + $0x78] sm:$0xf]
  %v2303 = vld [vmem:[%s7 + $0x7c] sm:$0xf]
  %v2304 = vld [vmem:[%s7 + $0x80] sm:$0xf]
  %v2305 = vld [vmem:[%s7 + $0x84] sm:$0xf]
  %v2306 = vld [vmem:[%s7 + $0x88] sm:$0xf]
  %v2307 = vld [vmem:[%s7 + $0x8c] sm:$0xf]
  %v2308 = vld [vmem:[%s7 + $0x90] sm:$0xf]
  %v2309 = vld [vmem:[%s7 + $0x94] sm:$0xf]
  %v2310 = vld [vmem:[%s7 + $0x98] sm:$0xf]
  %v2311 = vld [vmem:[%s7 + $0x9c] sm:$0xf]
  %v2312 = vld [vmem:[%s7 + $0xa0] sm:$0xf]
  %v2313 = vld [vmem:[%s7 + $0xa4] sm:$0xf]
  %v2314 = vld [vmem:[%s7 + $0xa8] sm:$0xf]
  %v2315 = vld [vmem:[%s7 + $0xac] sm:$0xf]
  %v2316 = vld [vmem:[%s7 + $0xb0] sm:$0xf]
  %v2317 = vld [vmem:[%s7 + $0xb4] sm:$0xf]
  %v2318 = vld [vmem:[%s7 + $0xb8] sm:$0xf]
  %v2319 = vld [vmem:[%s7 + $0xbc] sm:$0xf]
  %v2320 = vld [vmem:[%s7 + $0xc0] sm:$0xf]
  %v2321 = vld [vmem:[%s7 + $0xc4] sm:$0xf]
  %v2322 = vld [vmem:[%s7 + $0xc8] sm:$0xf]
  %v2323 = vld [vmem:[%s7 + $0xcc] sm:$0xf]
  %v2324 = vld [vmem:[%s7 + $0xd0] sm:$0xf]
  %v2325 = vld [vmem:[%s7 + $0xd4] sm:$0xf]
  %v2326 = vld [vmem:[%s7 + $0xd8] sm:$0xf]
  %v2327 = vld [vmem:[%s7 + $0xdc] sm:$0xf]
  %v2328 = vld [vmem:[%s7 + $0xe0] sm:$0xf]
  %v2329 = vld [vmem:[%s7 + $0xe4] sm:$0xf]
  %v2330 = vld [vmem:[%s7 + $0xe8] sm:$0xf]
  %v2331 = vld [vmem:[%s7 + $0xec] sm:$0xf]
  %v2332 = vld [vmem:[%s7 + $0xf0] sm:$0xf]
  %v2333 = vld [vmem:[%s7 + $0xf4] sm:$0xf]
  %v2334 = vld [vmem:[%s7 + $0xf8] sm:$0xf]
  %v2335 = vld [vmem:[%s7 + $0xfc] sm:$0xf]
  %v2336 = vld [vmem:[%s8] sm:$0x1]
  %v2338 = vlaneseq
  %v2339 = vshrl.u32 %v2338, 7
  %v2340 = vsub.s32 0, %v2339
  %v2341 = vrot.slane %v2336, %v2340
  %v2407 = vunpack.c.l.b16 %v2272
  %v2408 = vunpack.c.l.b16 %v2273
  %v2409 = vunpack.c.l.b16 %v2274
  %v2410 = vunpack.c.l.b16 %v2275
  %v2411 = vunpack.c.l.b16 %v2276
  %v2412 = vunpack.c.l.b16 %v2277
  %v2413 = vunpack.c.l.b16 %v2278
  %v2414 = vunpack.c.l.b16 %v2279
  %v2415 = vunpack.c.l.b16 %v2280
  %v2416 = vunpack.c.l.b16 %v2281
  %v2417 = vunpack.c.l.b16 %v2282
  %v2418 = vunpack.c.l.b16 %v2283
  %v2419 = vunpack.c.l.b16 %v2284
  %v2420 = vunpack.c.l.b16 %v2285
  %v2421 = vunpack.c.l.b16 %v2286
  %v2422 = vunpack.c.l.b16 %v2287
  %v2423 = vunpack.c.l.b16 %v2288
  %v2424 = vunpack.c.l.b16 %v2289
  %v2425 = vunpack.c.l.b16 %v2290
  %v2426 = vunpack.c.l.b16 %v2291
  %v2427 = vunpack.c.l.b16 %v2292
  %v2428 = vunpack.c.l.b16 %v2293
  %v2429 = vunpack.c.l.b16 %v2294
  %v2430 = vunpack.c.l.b16 %v2295
  %v2431 = vunpack.c.l.b16 %v2296
  %v2432 = vunpack.c.l.b16 %v2297
  %v2433 = vunpack.c.l.b16 %v2298
  %v2434 = vunpack.c.l.b16 %v2299
  %v2435 = vunpack.c.l.b16 %v2300
  %v2436 = vunpack.c.l.b16 %v2301
  %v2437 = vunpack.c.l.b16 %v2302
  %v2438 = vunpack.c.l.b16 %v2303
  %v2439 = vunpack.c.l.b16 %v2304
  %v2440 = vunpack.c.l.b16 %v2305
  %v2441 = vunpack.c.l.b16 %v2306
  %v2442 = vunpack.c.l.b16 %v2307
  %v2443 = vunpack.c.l.b16 %v2308
  %v2444 = vunpack.c.l.b16 %v2309
  %v2445 = vunpack.c.l.b16 %v2310
  %v2446 = vunpack.c.l.b16 %v2311
  %v2447 = vunpack.c.l.b16 %v2312
  %v2448 = vunpack.c.l.b16 %v2313
  %v2449 = vunpack.c.l.b16 %v2314
  %v2450 = vunpack.c.l.b16 %v2315
  %v2451 = vunpack.c.l.b16 %v2316
  %v2452 = vunpack.c.l.b16 %v2317
  %v2453 = vunpack.c.l.b16 %v2318
  %v2454 = vunpack.c.l.b16 %v2319
  %v2455 = vunpack.c.l.b16 %v2320
  %v2456 = vunpack.c.l.b16 %v2321
  %v2457 = vunpack.c.l.b16 %v2322
  %v2458 = vunpack.c.l.b16 %v2323
  %v2459 = vunpack.c.l.b16 %v2324
  %v2460 = vunpack.c.l.b16 %v2325
  %v2461 = vunpack.c.l.b16 %v2326
  %v2462 = vunpack.c.l.b16 %v2327
  %v2463 = vunpack.c.l.b16 %v2328
  %v2464 = vunpack.c.l.b16 %v2329
  %v2465 = vunpack.c.l.b16 %v2330
  %v2466 = vunpack.c.l.b16 %v2331
  %v2467 = vunpack.c.l.b16 %v2332
  %v2468 = vunpack.c.l.b16 %v2333
  %v2469 = vunpack.c.l.b16 %v2334
  %v2470 = vunpack.c.l.b16 %v2335
  %v2471 = vpack.c.b16 %v2408, %v2407
  %v2472 = vpack.c.b16 %v2410, %v2409
  %v2473 = vpack.c.b16 %v2412, %v2411
  %v2474 = vpack.c.b16 %v2414, %v2413
  %v2475 = vpack.c.b16 %v2416, %v2415
  %v2476 = vpack.c.b16 %v2418, %v2417
  %v2477 = vpack.c.b16 %v2420, %v2419
  %v2478 = vpack.c.b16 %v2422, %v2421
  %v2479 = vpack.c.b16 %v2424, %v2423
  %v2480 = vpack.c.b16 %v2426, %v2425
  %v2481 = vpack.c.b16 %v2428, %v2427
  %v2482 = vpack.c.b16 %v2430, %v2429
  %v2483 = vpack.c.b16 %v2432, %v2431
  %v2484 = vpack.c.b16 %v2434, %v2433
  %v2485 = vpack.c.b16 %v2436, %v2435
  %v2486 = vpack.c.b16 %v2438, %v2437
  %v2487 = vpack.c.b16 %v2440, %v2439
  %v2488 = vpack.c.b16 %v2442, %v2441
  %v2489 = vpack.c.b16 %v2444, %v2443
  %v2490 = vpack.c.b16 %v2446, %v2445
  %v2491 = vpack.c.b16 %v2448, %v2447
  %v2492 = vpack.c.b16 %v2450, %v2449
  %v2493 = vpack.c.b16 %v2452, %v2451
  %v2494 = vpack.c.b16 %v2454, %v2453
  %v2495 = vpack.c.b16 %v2456, %v2455
  %v2496 = vpack.c.b16 %v2458, %v2457
  %v2497 = vpack.c.b16 %v2460, %v2459
  %v2498 = vpack.c.b16 %v2462, %v2461
  %v2499 = vpack.c.b16 %v2464, %v2463
  %v2500 = vpack.c.b16 %v2466, %v2465
  %v2501 = vpack.c.b16 %v2468, %v2467
  %v2502 = vpack.c.b16 %v2470, %v2469
  %2535 = vmatprep.subr.bf16.mxu0 0
  %2536 = vmatpush1.bf16.msra.mxu0 %v2471
  %2537 = vmatprep.subr.bf16.mxu0 0
  %2538 = vmatpush1.bf16.msra.mxu0 %v2472
  %2539 = vmatprep.subr.bf16.mxu0 0
  %2540 = vmatpush1.bf16.msra.mxu0 %v2473
  %2541 = vmatprep.subr.bf16.mxu0 0
  %2542 = vmatpush1.bf16.msra.mxu0 %v2474
  %2543 = vmatprep.subr.bf16.mxu0 0
  %2544 = vmatpush1.bf16.msra.mxu0 %v2475
  %2545 = vmatprep.subr.bf16.mxu0 0
  %2546 = vmatpush1.bf16.msra.mxu0 %v2476
  %2547 = vmatprep.subr.bf16.mxu0 0
  %2548 = vmatpush1.bf16.msra.mxu0 %v2477
  %2549 = vmatprep.subr.bf16.mxu0 0
  %2550 = vmatpush1.bf16.msra.mxu0 %v2478
  %2551 = vmatprep.subr.bf16.mxu0 0
  %2552 = vmatpush1.bf16.msra.mxu0 %v2479
  %2553 = vmatprep.subr.bf16.mxu0 0
  %2554 = vmatpush1.bf16.msra.mxu0 %v2480
  %2555 = vmatprep.subr.bf16.mxu0 0
  %2556 = vmatpush1.bf16.msra.mxu0 %v2481
  %2557 = vmatprep.subr.bf16.mxu0 0
  %2558 = vmatpush1.bf16.msra.mxu0 %v2482
  %2559 = vmatprep.subr.bf16.mxu0 0
  %2560 = vmatpush1.bf16.msra.mxu0 %v2483
  %2561 = vmatprep.subr.bf16.mxu0 0
  %2562 = vmatpush1.bf16.msra.mxu0 %v2484
  %2563 = vmatprep.subr.bf16.mxu0 0
  %2564 = vmatpush1.bf16.msra.mxu0 %v2485
  %2565 = vmatprep.subr.bf16.mxu0 0
  %2566 = vmatpush1.bf16.msra.mxu0 %v2486
  %2567 = vmatprep.mubr.bf16.mxu0 %v2269
  %2568 = vmatmul.mubr.bf16.gmra.mrb[0].mxu0 %v2268
  %v2569 = vpop.f32.mrb[0].mxu0
  %v2570 = vadd.f32 %v2341, %v2569
  %v2571 = vpop.f32.mrb[0].mxu0
  %v2572 = vpop.f32.mrb[0].mxu0
  %v2573 = vadd.f32 %v2341, %v2572
  %v2574 = vpop.f32.mrb[0].mxu0
  %2575 = vdwg.mxu0
  %2576 = vmatprep.subr.bf16.mxu0 0
  %2577 = vmatpush1.bf16.msra.mxu0 %v2487
  %2578 = vmatprep.subr.bf16.mxu0 0
  %2579 = vmatpush1.bf16.msra.mxu0 %v2488
  %2580 = vmatprep.subr.bf16.mxu0 0
  %2581 = vmatpush1.bf16.msra.mxu0 %v2489
  %2582 = vmatprep.subr.bf16.mxu0 0
  %2583 = vmatpush1.bf16.msra.mxu0 %v2490
  %2584 = vmatprep.subr.bf16.mxu0 0
  %2585 = vmatpush1.bf16.msra.mxu0 %v2491
  %2586 = vmatprep.subr.bf16.mxu0 0
  %2587 = vmatpush1.bf16.msra.mxu0 %v2492
  %2588 = vmatprep.subr.bf16.mxu0 0
  %2589 = vmatpush1.bf16.msra.mxu0 %v2493
  %2590 = vmatprep.subr.bf16.mxu0 0
  %2591 = vmatpush1.bf16.msra.mxu0 %v2494
  %2592 = vmatprep.subr.bf16.mxu0 0
  %2593 = vmatpush1.bf16.msra.mxu0 %v2495
  %2594 = vmatprep.subr.bf16.mxu0 0
  %2595 = vmatpush1.bf16.msra.mxu0 %v2496
  %2596 = vmatprep.subr.bf16.mxu0 0
  %2597 = vmatpush1.bf16.msra.mxu0 %v2497
  %2598 = vmatprep.subr.bf16.mxu0 0
  %2599 = vmatpush1.bf16.msra.mxu0 %v2498
  %2600 = vmatprep.subr.bf16.mxu0 0
  %2601 = vmatpush1.bf16.msra.mxu0 %v2499
  %2602 = vmatprep.subr.bf16.mxu0 0
  %2603 = vmatpush1.bf16.msra.mxu0 %v2500
  %2604 = vmatprep.subr.bf16.mxu0 0
  %2605 = vmatpush1.bf16.msra.mxu0 %v2501
  %2606 = vmatprep.subr.bf16.mxu0 0
  %2607 = vmatpush1.bf16.msra.mxu0 %v2502
  %2608 = vmatprep.mubr.bf16.mxu0 %v2271
  %2609 = vmatmul.mubr.bf16.gmra.mrb[0].mxu0 %v2270
  %v2610 = vpop.f32.mrb[0].mxu0
  %v2611 = vadd.f32 %v2570, %v2610
  %v2612 = vpop.f32.mrb[0].mxu0
  %v2613 = vpop.f32.mrb[0].mxu0
  %v2614 = vadd.f32 %v2573, %v2613
  %v2615 = vpop.f32.mrb[0].mxu0
  %2616 = vdwg.mxu0
  %v2617 = vpack.c.bf16 %v2614, %v2611
  %v2619 = vunpack.c.l.b16 %v2617
  %v2620 = vunpack.c.h.b16 %v2617
  %v2621 = vpack.c.b16 %v2619, %v2619
  %v2622 = vpack.c.b16 %v2620, %v2620
  %2625 = vst [vmem:[%s9] sm:$0xf] %v2621
  %2626 = vst [vmem:[%s9 + $0x4] sm:$0xf] %v2622
  // Predicated region
  $region38: #{mlp_forward.1} parent=0 // pred_check
    _
  $region39: #{mlp_forward.1} parent=0 // pred_check_branch
    %2628 = sbr.rel (0) target = $region41
  $region40: #{mlp_forward.1} parent=0 // pred_region
    _
  $region41: #{mlp_forward.1} parent=0 // pred_fallthru
    _
  // Predicated region
  $region42: #{mlp_forward.1} parent=0 // pred_check
    _
  $region43: #{mlp_forward.1} parent=0 // pred_check_branch
    %2630 = sbr.rel (0) target = $region45
  $region44: #{mlp_forward.1} parent=0 // pred_region
    _
  $region45: #{mlp_forward.1} parent=0 // pred_fallthru
    _

</llo_original>
